<compile_context>
chip_gen: v7x
topology: tpu7x:2x2x1
jax: 0.10.0
libtpu: 0.0.40
codegen_flags: <defaults>
</compile_context>

<pallas_src>
import functools

import jax
import jax.numpy as jnp
from jax import lax
from jax.experimental import pallas as pl
from jax.experimental.pallas import tpu as pltpu

KERNEL_SIZE = 7
PAD = 3
HALO = 8              # halo block rows (sublane aligned, >= PAD)
LN_EPS = 1e-5


def _layernorm(v, w, b):
    mu = jnp.mean(v, axis=-1, keepdims=True)
    var = jnp.mean((v - mu) ** 2, axis=-1, keepdims=True)
    return (v - mu) * lax.rsqrt(var + LN_EPS) * w + b


def _star_relu(v, s, b):
    r = jnp.maximum(v, 0.0)
    return s * r * r + b


def convformer_kernel(x_ref, xl_ref, xr_ref,
                      ln1_w_ref, ln1_b_ref, w_pw1_ref, dw_ref, w_pw2_ref,
                      ln2_w_ref, ln2_b_ref, w_fc1_ref, w_fc2_ref,
                      sep_s_ref, sep_b_ref, mlp_s_ref, mlp_b_ref,
                      out_ref, *, n_total, hidden_chunk):
    n_idx = pl.program_id(1)
    x = x_ref[0]                                   # (TN, D) f32 residual tile
    tn = x.shape[0]
    tne = tn + 2 * HALO

    # ---------------- token mixer: SepConv(LayerNorm1(x)) ----------------
    # Halo-extended tile: [8 rows of prev tile | tile | 8 rows of next tile].
    x_ext = jnp.concatenate([xl_ref[0], x, xr_ref[0]], axis=0)    # (TN+16, D)
    y = _layernorm(x_ext, ln1_w_ref[...], ln1_b_ref[...])
    t = jnp.dot(y.astype(jnp.bfloat16), w_pw1_ref[...],
                preferred_element_type=jnp.float32)               # (TN+16, M)
    t = _star_relu(t, sep_s_ref[0, 0], sep_b_ref[0, 0])

    # Zero rows that fall outside the sequence: this realizes the conv's zero
    # padding and kills the clamped halo rows of the first / last tile.
    row = lax.broadcasted_iota(jnp.int32, (tne, 1), 0)
    gpos = n_idx * tn + row - HALO                                # global seq pos
    t = jnp.where(jnp.logical_and(gpos >= 0, gpos < n_total), t, 0.0)

    # Depthwise 1-D conv (k=7, pad=3) along the sequence via XLU rolls:
    #   conv[i] = sum_k dw[k] * t[i + HALO + k - PAD]
    dw = dw_ref[...]                                              # (7, M) f32
    acc = None
    for k in range(KERNEL_SIZE):
        shift = (PAD - k) % tne
        shifted = t if shift == 0 else pltpu.roll(t, shift, axis=0)
        term = dw[k:k + 1, :] * shifted
        acc = term if acc is None else acc + term
    conv = acc[HALO:HALO + tn, :]                                 # (TN, M)

    mix = jnp.dot(conv.astype(jnp.bfloat16), w_pw2_ref[...],
                  preferred_element_type=jnp.float32)             # (TN, D)
    x1 = x + mix

    # ---------------- MLP branch: Mlp(LayerNorm2(x)) ----------------
    y2 = _layernorm(x1, ln2_w_ref[...], ln2_b_ref[...]).astype(jnp.bfloat16)
    hidden = w_fc1_ref.shape[1]
    mlp_s = mlp_s_ref[0, 0]
    mlp_b = mlp_b_ref[0, 0]
    m = jnp.zeros_like(x1)
    for c in range(hidden // hidden_chunk):                       # static loop
        lo = c * hidden_chunk
        h = jnp.dot(y2, w_fc1_ref[:, lo:lo + hidden_chunk],
                    preferred_element_type=jnp.float32)           # (TN, Hc)
        h = _star_relu(h, mlp_s, mlp_b)
        m = m + jnp.dot(h.astype(jnp.bfloat16),
                        w_fc2_ref[lo:lo + hidden_chunk, :],
                        preferred_element_type=jnp.float32)       # (TN, D)

    out_ref[0] = x1 + m


def _choose_seq_tile(n):
    best = 8
    t = 8
    while t <= min(n, 256):
        if n % t == 0:
            best = t
        t += 8
    return best


def _choose_hidden_chunk(h):
    if h <= 512:
        return h
    for c in (512, 384, 256, 128):
        if h % c == 0:
            return c
    return h


def _vmem_limit_bytes(tn, d, m, h, hc):
    tne = tn + 2 * HALO
    blocks = 2 * 4 * (tn * d + 2 * HALO * d + tn * d)          # f32 x/halos/out, x2 buf
    weights = 2 * 2 * (d * m + m * d + d * h + h * d)          # bf16 weights, x2 buf
    weights += 2 * 4 * (4 * d + KERNEL_SIZE * m)               # LN params + conv taps
    interm = 4 * (tne * d + 2 * tne * m + tn * hc + 6 * tn * d)
    est = blocks + weights + interm + (4 << 20)                # + slack
    return int(min(100 * 2 ** 20, max(32 * 2 ** 20, est)))


def convformer_block_nld(x_bnd, p, *, seq_tile=None, hidden_chunk=None):
    """Channels-last entry point: x (B, N, D) f32 -> (B, N, D) f32."""
    B, N, D = x_bnd.shape
    assert N % HALO == 0, "sequence length must be a multiple of 8"
    tn = seq_tile or _choose_seq_tile(N)
    assert tn % HALO == 0 and N % tn == 0, (tn, N)
    n_tiles = N // tn
    nb8 = N // HALO                    # number of 8-row halo blocks in the sequence
    tb8 = tn // HALO                   # 8-row blocks per sequence tile

    M = p["w_pw1"].shape[1]
    H = p["w_fc1"].shape[1]
    hc = hidden_chunk or _choose_hidden_chunk(H)
    assert H % hc == 0, (H, hc)

    bf16 = jnp.bfloat16
    w_pw1 = p["w_pw1"].astype(bf16)
    w_pw2 = p["w_pw2"].astype(bf16)
    w_fc1 = p["w_fc1"].astype(bf16)
    w_fc2 = p["w_fc2"].astype(bf16)

    def const(shape):
        return pl.BlockSpec(shape, lambda b, n, _r=len(shape): (0,) * _r)

    smem = pl.BlockSpec(memory_space=pltpu.MemorySpace.SMEM)

    kern = functools.partial(convformer_kernel, n_total=N, hidden_chunk=hc)

    out = pl.pallas_call(
        kern,
        out_shape=jax.ShapeDtypeStruct((B, N, D), jnp.float32),
        grid=(B, n_tiles),
        in_specs=[
            # residual tile + 8-row halos (clamped at sequence ends, masked in-kernel)
            pl.BlockSpec((1, tn, D), lambda b, n: (b, n, 0)),
            pl.BlockSpec((1, HALO, D),
                         lambda b, n: (b, jnp.maximum(n * tb8 - 1, 0), 0)),
            pl.BlockSpec((1, HALO, D),
                         lambda b, n: (b, jnp.minimum((n + 1) * tb8, nb8 - 1), 0)),
            const((1, D)), const((1, D)),                         # ln1 w / b
            const((D, M)),                                        # pwconv1 (bf16)
            const((KERNEL_SIZE, M)),                              # depthwise taps (f32)
            const((M, D)),                                        # pwconv2 (bf16)
            const((1, D)), const((1, D)),                         # ln2 w / b
            const((D, H)), const((H, D)),                         # fc1 / fc2 (bf16)
            smem, smem, smem, smem,                               # StarReLU scalars
        ],
        out_specs=pl.BlockSpec((1, tn, D), lambda b, n: (b, n, 0)),
        compiler_params=pltpu.CompilerParams(
            dimension_semantics=("parallel", "parallel"),
            vmem_limit_bytes=_vmem_limit_bytes(tn, D, M, H, hc)),
    )(x_bnd, x_bnd, x_bnd,
      p["ln1_w"], p["ln1_b"], w_pw1, p["dw"], w_pw2,
      p["ln2_w"], p["ln2_b"], w_fc1, w_fc2,
      p["sep_s"], p["sep_b"], p["mlp_s"], p["mlp_b"])
    return out


def convformer_block(x_bdn, p, *, seq_tile=None, hidden_chunk=None):
    """PyTorch-layout entry point: x (B, dim, N) -> (B, dim, N)."""
    # TODO(synk): feed channels-last activations end-to-end (convformer_block_nld)
    # to avoid these two extra HBM transpose passes around the kernel.
    x = jnp.transpose(x_bdn, (0, 2, 1))
    y = convformer_block_nld(x, p, seq_tile=seq_tile, hidden_chunk=hidden_chunk)
    return jnp.transpose(y, (0, 2, 1))


def convformer_ref(x_bdn, p, *, mixed_precision=False):
    """Pure-JAX reference.  mixed_precision=True mirrors the kernel's
    bf16-operand / f32-accumulate matmuls; False is the full-f32 math."""
    cast = (lambda a: a.astype(jnp.bfloat16)) if mixed_precision else (lambda a: a)
    x = jnp.transpose(x_bdn, (0, 2, 1)).astype(jnp.float32)       # (B, N, D)
    N = x.shape[1]

    def ln(v, w, b):
        mu = jnp.mean(v, axis=-1, keepdims=True)
        var = jnp.mean((v - mu) ** 2, axis=-1, keepdims=True)
        return (v - mu) * lax.rsqrt(var + LN_EPS) * w + b

    def star(v, s, b):
        return s * jnp.maximum(v, 0.0) ** 2 + b

    def mm(a, w):
        return jnp.einsum("bnk,kd->bnd", cast(a), cast(w),
                          preferred_element_type=jnp.float32)

    # SepConv(norm1(x))
    y = ln(x, p["ln1_w"][0], p["ln1_b"][0])
    t = star(mm(y, p["w_pw1"]), p["sep_s"][0, 0], p["sep_b"][0, 0])
    t_pad = jnp.pad(t, ((0, 0), (PAD, PAD), (0, 0)))
    conv = sum(t_pad[:, k:k + N, :] * p["dw"][k][None, None, :]
               for k in range(KERNEL_SIZE))
    x = x + mm(conv, p["w_pw2"])

    # Mlp(norm2(x))
    y = ln(x, p["ln2_w"][0], p["ln2_b"][0])
    h = star(mm(y, p["w_fc1"]), p["mlp_s"][0, 0], p["mlp_b"][0, 0])
    x = x + mm(h, p["w_fc2"])
    return jnp.transpose(x, (0, 2, 1))


def init_params(key, dim):
    med = 2 * dim        # SepConv expansion_ratio = 2
    hid = 4 * dim        # Mlp mlp_ratio = 4
    ks = jax.random.split(key, 9)
    p = {
        # LayerNorm affine (perturbed from the default 1/0 so it is exercised).
        "ln1_w": 1.0 + 0.1 * jax.random.normal(ks[0], (1, dim), jnp.float32),
        "ln1_b": 0.1 * jax.random.normal(ks[1], (1, dim), jnp.float32),
        "ln2_w": 1.0 + 0.1 * jax.random.normal(ks[2], (1, dim), jnp.float32),
        "ln2_b": 0.1 * jax.random.normal(ks[3], (1, dim), jnp.float32),
        # Linear weights stored pre-transposed: y = x @ W  (PyTorch: x @ W.T).
        "w_pw1": 0.1 * jax.random.normal(ks[4], (dim, med), jnp.float32),
        "w_pw2": 0.1 * jax.random.normal(ks[5], (med, dim), jnp.float32),
        "w_fc1": 0.1 * jax.random.normal(ks[6], (dim, hid), jnp.float32),
        "w_fc2": 0.1 * jax.random.normal(ks[7], (hid, dim), jnp.float32),
        # StarReLU learnable scalars (non-default values so the SMEM scalar
        # plumbing is actually tested).
        "sep_s": jnp.full((1, 1), 1.1, jnp.float32),
        "sep_b": jnp.full((1, 1), -0.05, jnp.float32),
        "mlp_s": jnp.full((1, 1), 0.9, jnp.float32),
        "mlp_b": jnp.full((1, 1), 0.02, jnp.float32),
    }
    # Full depthwise Conv2d weight (med, 1, 7, 7); only kernel column PAD=3 is
    # mathematically reachable because the conv input width is 1.
    dw_full = 0.1 * jax.random.normal(ks[8], (med, 1, KERNEL_SIZE, KERNEL_SIZE),
                                      jnp.float32)
    p["dw"] = jnp.transpose(dw_full[:, 0, :, PAD], (1, 0))        # (7, med)
    return p


if __name__ == "__main__":
    # Small but TPU-friendly shapes (dim=128 is the first-stage width of the
    # ConvFormer config mentioned in the module docstring).
    B, dim, N = 2, 128, 32
    key = jax.random.PRNGKey(0)
    kx, kp = jax.random.split(key)
    x = jax.random.normal(kx, (B, dim, N), jnp.float32)
    params = init_params(kp, dim)

    # seq_tile=8 -> 4 sequence tiles per batch element (exercises the conv halo
    # across tile edges); hidden_chunk=256 -> 2 MLP hidden chunks.
    out = jax.block_until_ready(
        convformer_block(x, params, seq_tile=8, hidden_chunk=256))
    assert out.shape == (B, dim, N), out.shape

    # Reference mirroring the kernel's bf16-operand / f32-accumulate matmuls.
    ref_mixed = convformer_ref(x, params, mixed_precision=True)
    err_mixed = float(jnp.max(jnp.abs(out - ref_mixed)))
    assert jnp.allclose(out, ref_mixed, rtol=5e-3, atol=5e-3), err_mixed

    # Full-f32 reference (PyTorch math); bounded relative to the output range
    # since the kernel intentionally uses bf16 MXU operands.
    ref_f32 = convformer_ref(x, params, mixed_precision=False)
    err_f32 = float(jnp.max(jnp.abs(out - ref_f32)))
    scale = float(jnp.max(jnp.abs(ref_f32)))
    assert err_f32 <= 5e-2 * scale + 5e-2, (err_f32, scale)

    print("KERNEL_OK")
</pallas_src>

<mosaic_0001>
module attributes {stable_mosaic.version = 11 : i64} {
  func.func @convformer_kernel(%arg0: i32, %arg1: i32, %arg2: memref<1x8x128xf32, #tpu.memory_space<vmem>>, %arg3: memref<1x8x128xf32, #tpu.memory_space<vmem>>, %arg4: memref<1x8x128xf32, #tpu.memory_space<vmem>>, %arg5: memref<1x128xf32, #tpu.memory_space<vmem>>, %arg6: memref<1x128xf32, #tpu.memory_space<vmem>>, %arg7: memref<128x256xbf16, #tpu.memory_space<vmem>>, %arg8: memref<7x256xf32, #tpu.memory_space<vmem>>, %arg9: memref<256x128xbf16, #tpu.memory_space<vmem>>, %arg10: memref<1x128xf32, #tpu.memory_space<vmem>>, %arg11: memref<1x128xf32, #tpu.memory_space<vmem>>, %arg12: memref<128x512xbf16, #tpu.memory_space<vmem>>, %arg13: memref<512x128xbf16, #tpu.memory_space<vmem>>, %arg14: memref<1x1xf32, #tpu.memory_space<smem>>, %arg15: memref<1x1xf32, #tpu.memory_space<smem>>, %arg16: memref<1x1xf32, #tpu.memory_space<smem>>, %arg17: memref<1x1xf32, #tpu.memory_space<smem>>, %arg18: memref<1x8x128xf32, #tpu.memory_space<vmem>>) attributes {dimension_semantics = [#tpu.dimension_semantics<parallel>, #tpu.dimension_semantics<parallel>], iteration_bounds = array<i64: 2, 4>, scalar_prefetch = 0 : i64, scratch_operands = 0 : i64, tpu.core_type = #tpu.core_type<tc>, window_params = [{transform_indices = @transform_0, window_bounds = array<i64: 1, 8, 128>}, {transform_indices = @transform_1, window_bounds = array<i64: 1, 8, 128>}, {transform_indices = @transform_2, window_bounds = array<i64: 1, 8, 128>}, {pipeline_mode = #tpu.pipeline_mode<synchronous>, transform_indices = @transform_3, window_bounds = array<i64: 1, 128>}, {pipeline_mode = #tpu.pipeline_mode<synchronous>, transform_indices = @transform_4, window_bounds = array<i64: 1, 128>}, {pipeline_mode = #tpu.pipeline_mode<synchronous>, transform_indices = @transform_5, window_bounds = array<i64: 128, 256>}, {pipeline_mode = #tpu.pipeline_mode<synchronous>, transform_indices = @transform_6, window_bounds = array<i64: 7, 256>}, {pipeline_mode = #tpu.pipeline_mode<synchronous>, transform_indices = @transform_7, window_bounds = array<i64: 256, 128>}, {pipeline_mode = #tpu.pipeline_mode<synchronous>, transform_indices = @transform_8, window_bounds = array<i64: 1, 128>}, {pipeline_mode = #tpu.pipeline_mode<synchronous>, transform_indices = @transform_9, window_bounds = array<i64: 1, 128>}, {pipeline_mode = #tpu.pipeline_mode<synchronous>, transform_indices = @transform_10, window_bounds = array<i64: 128, 512>}, {pipeline_mode = #tpu.pipeline_mode<synchronous>, transform_indices = @transform_11, window_bounds = array<i64: 512, 128>}, {transform_indices = @transform_12, window_bounds = array<i64: 1, 1>}, {transform_indices = @transform_13, window_bounds = array<i64: 1, 1>}, {transform_indices = @transform_14, window_bounds = array<i64: 1, 1>}, {transform_indices = @transform_15, window_bounds = array<i64: 1, 1>}, {transform_indices = @transform_16, window_bounds = array<i64: 1, 8, 128>}]} {
    %c0 = arith.constant 0 : index
    %c0_0 = arith.constant 0 : index
    %c0_1 = arith.constant 0 : index
    %0 = vector.load %arg2[%c0, %c0_0, %c0_1] : memref<1x8x128xf32, #tpu.memory_space<vmem>>, vector<1x8x128xf32>
    %1 = vector.shape_cast %0 : vector<1x8x128xf32> to vector<8x128xf32>
    %c0_2 = arith.constant 0 : index
    %c0_3 = arith.constant 0 : index
    %c0_4 = arith.constant 0 : index
    %2 = vector.load %arg3[%c0_2, %c0_3, %c0_4] : memref<1x8x128xf32, #tpu.memory_space<vmem>>, vector<1x8x128xf32>
    %3 = vector.shape_cast %2 : vector<1x8x128xf32> to vector<8x128xf32>
    %c0_5 = arith.constant 0 : index
    %c0_6 = arith.constant 0 : index
    %c0_7 = arith.constant 0 : index
    %4 = vector.load %arg4[%c0_5, %c0_6, %c0_7] : memref<1x8x128xf32, #tpu.memory_space<vmem>>, vector<1x8x128xf32>
    %5 = vector.shape_cast %4 : vector<1x8x128xf32> to vector<8x128xf32>
    %6 = tpu.concatenate %3, %1, %5 in 0 : vector<8x128xf32>, vector<8x128xf32>, vector<8x128xf32> -> vector<24x128xf32>
    %c0_8 = arith.constant 0 : index
    %c0_9 = arith.constant 0 : index
    %7 = vector.load %arg5[%c0_8, %c0_9] : memref<1x128xf32, #tpu.memory_space<vmem>>, vector<1x128xf32>
    %c0_10 = arith.constant 0 : index
    %c0_11 = arith.constant 0 : index
    %8 = vector.load %arg6[%c0_10, %c0_11] : memref<1x128xf32, #tpu.memory_space<vmem>>, vector<1x128xf32>
    %cst = arith.constant dense<0.000000e+00> : vector<24xf32>
    %9 = vector.multi_reduction <add>, %6, %cst [1] : vector<24x128xf32> to vector<24xf32>
    %10 = vector.shape_cast %9 : vector<24xf32> to vector<24x1xf32>
    %cst_12 = arith.constant 1.280000e+02 : f32
    %11 = vector.broadcast %cst_12 : f32 to vector<24x1xf32>
    %12 = arith.divf %10, %11 : vector<24x1xf32>
    %13 = vector.broadcast %12 : vector<24x1xf32> to vector<24x128xf32>
    %14 = arith.subf %6, %13 : vector<24x128xf32>
    %15 = arith.mulf %14, %14 : vector<24x128xf32>
    %cst_13 = arith.constant dense<0.000000e+00> : vector<24xf32>
    %16 = vector.multi_reduction <add>, %15, %cst_13 [1] : vector<24x128xf32> to vector<24xf32>
    %17 = vector.shape_cast %16 : vector<24xf32> to vector<24x1xf32>
    %cst_14 = arith.constant 1.280000e+02 : f32
    %18 = vector.broadcast %cst_14 : f32 to vector<24x1xf32>
    %19 = arith.divf %17, %18 : vector<24x1xf32>
    %20 = vector.broadcast %12 : vector<24x1xf32> to vector<24x128xf32>
    %21 = arith.subf %6, %20 : vector<24x128xf32>
    %cst_15 = arith.constant 9.99999974E-6 : f32
    %22 = vector.broadcast %cst_15 : f32 to vector<24x1xf32>
    %23 = arith.addf %19, %22 : vector<24x1xf32>
    %24 = math.rsqrt %23 : vector<24x1xf32>
    %25 = vector.broadcast %24 : vector<24x1xf32> to vector<24x128xf32>
    %26 = arith.mulf %21, %25 : vector<24x128xf32>
    %27 = vector.broadcast %7 : vector<1x128xf32> to vector<24x128xf32>
    %28 = arith.mulf %26, %27 : vector<24x128xf32>
    %29 = vector.broadcast %8 : vector<1x128xf32> to vector<24x128xf32>
    %30 = arith.addf %28, %29 : vector<24x128xf32>
    %31 = arith.truncf %30 : vector<24x128xf32> to vector<24x128xbf16>
    %c0_16 = arith.constant 0 : index
    %c0_17 = arith.constant 0 : index
    %32 = vector.load %arg7[%c0_16, %c0_17] : memref<128x256xbf16, #tpu.memory_space<vmem>>, vector<128x256xbf16>
    %cst_18 = arith.constant dense<0.000000e+00> : vector<24x256xf32>
    %33 = tpu.matmul %31, %32, %cst_18 {dimension_numbers = #tpu.dot_dimension_numbers<[1], [0], [0], [1], [0, 0, 1, 1], [], []>} : vector<24x128xbf16>, vector<128x256xbf16>, vector<24x256xf32> -> vector<24x256xf32>
    %c0_19 = arith.constant 0 : index
    %c0_20 = arith.constant 0 : index
    %34 = memref.load %arg14[%c0_19, %c0_20] : memref<1x1xf32, #tpu.memory_space<smem>>
    %c0_21 = arith.constant 0 : index
    %c0_22 = arith.constant 0 : index
    %35 = memref.load %arg15[%c0_21, %c0_22] : memref<1x1xf32, #tpu.memory_space<smem>>
    %cst_23 = arith.constant 0.000000e+00 : f32
    %36 = vector.broadcast %cst_23 : f32 to vector<24x256xf32>
    %37 = arith.maximumf %33, %36 : vector<24x256xf32>
    %38 = vector.broadcast %34 : f32 to vector<24x256xf32>
    %39 = arith.mulf %38, %37 : vector<24x256xf32>
    %40 = arith.mulf %39, %37 : vector<24x256xf32>
    %41 = vector.broadcast %35 : f32 to vector<24x256xf32>
    %42 = arith.addf %40, %41 : vector<24x256xf32>
    %43 = tpu.iota {dimensions = array<i32: 0>} : vector<24x1xi32>
    %c8_i32 = arith.constant 8 : i32
    %44 = arith.muli %arg1, %c8_i32 : i32
    %45 = vector.broadcast %44 : i32 to vector<24x1xi32>
    %46 = arith.addi %45, %43 : vector<24x1xi32>
    %c8_i32_24 = arith.constant 8 : i32
    %47 = vector.broadcast %c8_i32_24 : i32 to vector<24x1xi32>
    %48 = arith.subi %46, %47 : vector<24x1xi32>
    %c0_i32 = arith.constant 0 : i32
    %49 = vector.broadcast %c0_i32 : i32 to vector<24x1xi32>
    %50 = arith.cmpi sge, %48, %49 : vector<24x1xi32>
    %c32_i32 = arith.constant 32 : i32
    %51 = vector.broadcast %c32_i32 : i32 to vector<24x1xi32>
    %52 = arith.cmpi slt, %48, %51 : vector<24x1xi32>
    %53 = arith.andi %50, %52 : vector<24x1xi1>
    %cst_25 = arith.constant 0.000000e+00 : f32
    %54 = vector.shape_cast %53 : vector<24x1xi1> to vector<24x1xi1>
    %55 = vector.broadcast %54 : vector<24x1xi1> to vector<24x256xi1>
    %56 = vector.broadcast %cst_25 : f32 to vector<24x256xf32>
    %57 = arith.select %55, %42, %56 : vector<24x256xi1>, vector<24x256xf32>
    %c0_26 = arith.constant 0 : index
    %c0_27 = arith.constant 0 : index
    %58 = vector.load %arg8[%c0_26, %c0_27] : memref<7x256xf32, #tpu.memory_space<vmem>>, vector<7x256xf32>
    %c3_i32 = arith.constant 3 : i32
    %59 = tpu.dynamic_rotate %57 by %c3_i32 dim 0 : vector<24x256xf32>, i32 -> vector<24x256xf32>
    %60 = vector.extract_strided_slice %58 {offsets = [0, 0], sizes = [1, 256], strides = [1, 1]} : vector<7x256xf32> to vector<1x256xf32>
    %61 = vector.broadcast %60 : vector<1x256xf32> to vector<24x256xf32>
    %62 = arith.mulf %61, %59 : vector<24x256xf32>
    %c2_i32 = arith.constant 2 : i32
    %63 = tpu.dynamic_rotate %57 by %c2_i32 dim 0 : vector<24x256xf32>, i32 -> vector<24x256xf32>
    %64 = vector.extract_strided_slice %58 {offsets = [1, 0], sizes = [1, 256], strides = [1, 1]} : vector<7x256xf32> to vector<1x256xf32>
    %65 = vector.broadcast %64 : vector<1x256xf32> to vector<24x256xf32>
    %66 = arith.mulf %65, %63 : vector<24x256xf32>
    %67 = arith.addf %62, %66 : vector<24x256xf32>
    %c1_i32 = arith.constant 1 : i32
    %68 = tpu.dynamic_rotate %57 by %c1_i32 dim 0 : vector<24x256xf32>, i32 -> vector<24x256xf32>
    %69 = vector.extract_strided_slice %58 {offsets = [2, 0], sizes = [1, 256], strides = [1, 1]} : vector<7x256xf32> to vector<1x256xf32>
    %70 = vector.broadcast %69 : vector<1x256xf32> to vector<24x256xf32>
    %71 = arith.mulf %70, %68 : vector<24x256xf32>
    %72 = arith.addf %67, %71 : vector<24x256xf32>
    %73 = vector.extract_strided_slice %58 {offsets = [3, 0], sizes = [1, 256], strides = [1, 1]} : vector<7x256xf32> to vector<1x256xf32>
    %74 = vector.broadcast %73 : vector<1x256xf32> to vector<24x256xf32>
    %75 = arith.mulf %74, %57 : vector<24x256xf32>
    %76 = arith.addf %72, %75 : vector<24x256xf32>
    %c23_i32 = arith.constant 23 : i32
    %77 = tpu.dynamic_rotate %57 by %c23_i32 dim 0 : vector<24x256xf32>, i32 -> vector<24x256xf32>
    %78 = vector.extract_strided_slice %58 {offsets = [4, 0], sizes = [1, 256], strides = [1, 1]} : vector<7x256xf32> to vector<1x256xf32>
    %79 = vector.broadcast %78 : vector<1x256xf32> to vector<24x256xf32>
    %80 = arith.mulf %79, %77 : vector<24x256xf32>
    %81 = arith.addf %76, %80 : vector<24x256xf32>
    %c22_i32 = arith.constant 22 : i32
    %82 = tpu.dynamic_rotate %57 by %c22_i32 dim 0 : vector<24x256xf32>, i32 -> vector<24x256xf32>
    %83 = vector.extract_strided_slice %58 {offsets = [5, 0], sizes = [1, 256], strides = [1, 1]} : vector<7x256xf32> to vector<1x256xf32>
    %84 = vector.broadcast %83 : vector<1x256xf32> to vector<24x256xf32>
    %85 = arith.mulf %84, %82 : vector<24x256xf32>
    %86 = arith.addf %81, %85 : vector<24x256xf32>
    %c21_i32 = arith.constant 21 : i32
    %87 = tpu.dynamic_rotate %57 by %c21_i32 dim 0 : vector<24x256xf32>, i32 -> vector<24x256xf32>
    %88 = vector.extract_strided_slice %58 {offsets = [6, 0], sizes = [1, 256], strides = [1, 1]} : vector<7x256xf32> to vector<1x256xf32>
    %89 = vector.broadcast %88 : vector<1x256xf32> to vector<24x256xf32>
    %90 = arith.mulf %89, %87 : vector<24x256xf32>
    %91 = arith.addf %86, %90 : vector<24x256xf32>
    %92 = vector.extract_strided_slice %91 {offsets = [8, 0], sizes = [8, 256], strides = [1, 1]} : vector<24x256xf32> to vector<8x256xf32>
    %93 = arith.truncf %92 : vector<8x256xf32> to vector<8x256xbf16>
    %c0_28 = arith.constant 0 : index
    %c0_29 = arith.constant 0 : index
    %94 = vector.load %arg9[%c0_28, %c0_29] : memref<256x128xbf16, #tpu.memory_space<vmem>>, vector<256x128xbf16>
    %cst_30 = arith.constant dense<0.000000e+00> : vector<8x128xf32>
    %95 = tpu.matmul %93, %94, %cst_30 {dimension_numbers = #tpu.dot_dimension_numbers<[1], [0], [0], [1], [0, 0, 1, 1], [], []>} : vector<8x256xbf16>, vector<256x128xbf16>, vector<8x128xf32> -> vector<8x128xf32>
    %96 = arith.addf %1, %95 : vector<8x128xf32>
    %c0_31 = arith.constant 0 : index
    %c0_32 = arith.constant 0 : index
    %97 = vector.load %arg10[%c0_31, %c0_32] : memref<1x128xf32, #tpu.memory_space<vmem>>, vector<1x128xf32>
    %c0_33 = arith.constant 0 : index
    %c0_34 = arith.constant 0 : index
    %98 = vector.load %arg11[%c0_33, %c0_34] : memref<1x128xf32, #tpu.memory_space<vmem>>, vector<1x128xf32>
    %cst_35 = arith.constant dense<0.000000e+00> : vector<8xf32>
    %99 = vector.multi_reduction <add>, %96, %cst_35 [1] : vector<8x128xf32> to vector<8xf32>
    %100 = vector.shape_cast %99 : vector<8xf32> to vector<8x1xf32>
    %cst_36 = arith.constant 1.280000e+02 : f32
    %101 = vector.broadcast %cst_36 : f32 to vector<8x1xf32>
    %102 = arith.divf %100, %101 : vector<8x1xf32>
    %103 = vector.broadcast %102 : vector<8x1xf32> to vector<8x128xf32>
    %104 = arith.subf %96, %103 : vector<8x128xf32>
    %105 = arith.mulf %104, %104 : vector<8x128xf32>
    %cst_37 = arith.constant dense<0.000000e+00> : vector<8xf32>
    %106 = vector.multi_reduction <add>, %105, %cst_37 [1] : vector<8x128xf32> to vector<8xf32>
    %107 = vector.shape_cast %106 : vector<8xf32> to vector<8x1xf32>
    %cst_38 = arith.constant 1.280000e+02 : f32
    %108 = vector.broadcast %cst_38 : f32 to vector<8x1xf32>
    %109 = arith.divf %107, %108 : vector<8x1xf32>
    %110 = vector.broadcast %102 : vector<8x1xf32> to vector<8x128xf32>
    %111 = arith.subf %96, %110 : vector<8x128xf32>
    %cst_39 = arith.constant 9.99999974E-6 : f32
    %112 = vector.broadcast %cst_39 : f32 to vector<8x1xf32>
    %113 = arith.addf %109, %112 : vector<8x1xf32>
    %114 = math.rsqrt %113 : vector<8x1xf32>
    %115 = vector.broadcast %114 : vector<8x1xf32> to vector<8x128xf32>
    %116 = arith.mulf %111, %115 : vector<8x128xf32>
    %117 = vector.broadcast %97 : vector<1x128xf32> to vector<8x128xf32>
    %118 = arith.mulf %116, %117 : vector<8x128xf32>
    %119 = vector.broadcast %98 : vector<1x128xf32> to vector<8x128xf32>
    %120 = arith.addf %118, %119 : vector<8x128xf32>
    %121 = arith.truncf %120 : vector<8x128xf32> to vector<8x128xbf16>
    %c0_40 = arith.constant 0 : index
    %c0_41 = arith.constant 0 : index
    %122 = memref.load %arg16[%c0_40, %c0_41] : memref<1x1xf32, #tpu.memory_space<smem>>
    %c0_42 = arith.constant 0 : index
    %c0_43 = arith.constant 0 : index
    %123 = memref.load %arg17[%c0_42, %c0_43] : memref<1x1xf32, #tpu.memory_space<smem>>
    %cst_44 = arith.constant 0.000000e+00 : f32
    %124 = vector.broadcast %cst_44 : f32 to vector<8x128xf32>
    %c0_45 = arith.constant 0 : index
    %c0_46 = arith.constant 0 : index
    %125 = vector.load %arg12[%c0_45, %c0_46] : memref<128x512xbf16, #tpu.memory_space<vmem>>, vector<128x256xbf16>
    %cst_47 = arith.constant dense<0.000000e+00> : vector<8x256xf32>
    %126 = tpu.matmul %121, %125, %cst_47 {dimension_numbers = #tpu.dot_dimension_numbers<[1], [0], [0], [1], [0, 0, 1, 1], [], []>} : vector<8x128xbf16>, vector<128x256xbf16>, vector<8x256xf32> -> vector<8x256xf32>
    %cst_48 = arith.constant 0.000000e+00 : f32
    %127 = vector.broadcast %cst_48 : f32 to vector<8x256xf32>
    %128 = arith.maximumf %126, %127 : vector<8x256xf32>
    %129 = vector.broadcast %122 : f32 to vector<8x256xf32>
    %130 = arith.mulf %129, %128 : vector<8x256xf32>
    %131 = arith.mulf %130, %128 : vector<8x256xf32>
    %132 = vector.broadcast %123 : f32 to vector<8x256xf32>
    %133 = arith.addf %131, %132 : vector<8x256xf32>
    %134 = arith.truncf %133 : vector<8x256xf32> to vector<8x256xbf16>
    %c0_49 = arith.constant 0 : index
    %c0_50 = arith.constant 0 : index
    %135 = vector.load %arg13[%c0_49, %c0_50] : memref<512x128xbf16, #tpu.memory_space<vmem>>, vector<256x128xbf16>
    %cst_51 = arith.constant dense<0.000000e+00> : vector<8x128xf32>
    %136 = tpu.matmul %134, %135, %cst_51 {dimension_numbers = #tpu.dot_dimension_numbers<[1], [0], [0], [1], [0, 0, 1, 1], [], []>} : vector<8x256xbf16>, vector<256x128xbf16>, vector<8x128xf32> -> vector<8x128xf32>
    %137 = arith.addf %124, %136 : vector<8x128xf32>
    %c0_52 = arith.constant 0 : index
    %c256 = arith.constant 256 : index
    %138 = vector.load %arg12[%c0_52, %c256] : memref<128x512xbf16, #tpu.memory_space<vmem>>, vector<128x256xbf16>
    %cst_53 = arith.constant dense<0.000000e+00> : vector<8x256xf32>
    %139 = tpu.matmul %121, %138, %cst_53 {dimension_numbers = #tpu.dot_dimension_numbers<[1], [0], [0], [1], [0, 0, 1, 1], [], []>} : vector<8x128xbf16>, vector<128x256xbf16>, vector<8x256xf32> -> vector<8x256xf32>
    %cst_54 = arith.constant 0.000000e+00 : f32
    %140 = vector.broadcast %cst_54 : f32 to vector<8x256xf32>
    %141 = arith.maximumf %139, %140 : vector<8x256xf32>
    %142 = vector.broadcast %122 : f32 to vector<8x256xf32>
    %143 = arith.mulf %142, %141 : vector<8x256xf32>
    %144 = arith.mulf %143, %141 : vector<8x256xf32>
    %145 = vector.broadcast %123 : f32 to vector<8x256xf32>
    %146 = arith.addf %144, %145 : vector<8x256xf32>
    %147 = arith.truncf %146 : vector<8x256xf32> to vector<8x256xbf16>
    %c256_55 = arith.constant 256 : index
    %c0_56 = arith.constant 0 : index
    %148 = vector.load %arg13[%c256_55, %c0_56] : memref<512x128xbf16, #tpu.memory_space<vmem>>, vector<256x128xbf16>
    %cst_57 = arith.constant dense<0.000000e+00> : vector<8x128xf32>
    %149 = tpu.matmul %147, %148, %cst_57 {dimension_numbers = #tpu.dot_dimension_numbers<[1], [0], [0], [1], [0, 0, 1, 1], [], []>} : vector<8x256xbf16>, vector<256x128xbf16>, vector<8x128xf32> -> vector<8x128xf32>
    %150 = arith.addf %137, %149 : vector<8x128xf32>
    %151 = arith.addf %96, %150 : vector<8x128xf32>
    %c0_58 = arith.constant 0 : index
    %c0_59 = arith.constant 0 : index
    %c0_60 = arith.constant 0 : index
    %152 = vector.load %arg18[%c0_58, %c0_59, %c0_60] : memref<1x8x128xf32, #tpu.memory_space<vmem>>, vector<1x8x128xf32>
    %153 = vector.shape_cast %152 : vector<1x8x128xf32> to vector<8x128xf32>
    %154 = vector.shape_cast %151 : vector<8x128xf32> to vector<1x8x128xf32>
    tpu.vector_store %arg18[%c0_58, %c0_59, %c0_60], %154 {strides = array<i32>} : memref<1x8x128xf32, #tpu.memory_space<vmem>>, vector<1x8x128xf32>,
    return
  }
  func.func @transform_0(%arg0: i32, %arg1: i32) -> (i32, i32, i32) {
    %c0_i32 = arith.constant 0 : i32
    %c0_i32_0 = arith.constant 0 : i32
    return %arg0, %arg1, %c0_i32 : i32, i32, i32
  }
  func.func @transform_1(%arg0: i32, %arg1: i32) -> (i32, i32, i32) {
    %c1_i32 = arith.constant 1 : i32
    %0 = arith.muli %arg1, %c1_i32 : i32
    %c1_i32_0 = arith.constant 1 : i32
    %1 = arith.subi %0, %c1_i32_0 : i32
    %c0_i32 = arith.constant 0 : i32
    %2 = arith.maxsi %1, %c0_i32 : i32
    %c0_i32_1 = arith.constant 0 : i32
    %c0_i32_2 = arith.constant 0 : i32
    return %arg0, %2, %c0_i32_1 : i32, i32, i32
  }
  func.func @transform_2(%arg0: i32, %arg1: i32) -> (i32, i32, i32) {
    %c1_i32 = arith.constant 1 : i32
    %0 = arith.addi %arg1, %c1_i32 : i32
    %c1_i32_0 = arith.constant 1 : i32
    %1 = arith.muli %0, %c1_i32_0 : i32
    %c3_i32 = arith.constant 3 : i32
    %2 = arith.minsi %1, %c3_i32 : i32
    %c0_i32 = arith.constant 0 : i32
    %c0_i32_1 = arith.constant 0 : i32
    return %arg0, %2, %c0_i32 : i32, i32, i32
  }
  func.func @transform_3(%arg0: i32, %arg1: i32) -> (i32, i32) {
    %c0_i32 = arith.constant 0 : i32
    %c0_i32_0 = arith.constant 0 : i32
    %c0_i32_1 = arith.constant 0 : i32
    return %c0_i32, %c0_i32_0 : i32, i32
  }
  func.func @transform_4(%arg0: i32, %arg1: i32) -> (i32, i32) {
    %c0_i32 = arith.constant 0 : i32
    %c0_i32_0 = arith.constant 0 : i32
    %c0_i32_1 = arith.constant 0 : i32
    return %c0_i32, %c0_i32_0 : i32, i32
  }
  func.func @transform_5(%arg0: i32, %arg1: i32) -> (i32, i32) {
    %c0_i32 = arith.constant 0 : i32
    %c0_i32_0 = arith.constant 0 : i32
    %c0_i32_1 = arith.constant 0 : i32
    return %c0_i32, %c0_i32_0 : i32, i32
  }
  func.func @transform_6(%arg0: i32, %arg1: i32) -> (i32, i32) {
    %c0_i32 = arith.constant 0 : i32
    %c0_i32_0 = arith.constant 0 : i32
    %c0_i32_1 = arith.constant 0 : i32
    return %c0_i32, %c0_i32_0 : i32, i32
  }
  func.func @transform_7(%arg0: i32, %arg1: i32) -> (i32, i32) {
    %c0_i32 = arith.constant 0 : i32
    %c0_i32_0 = arith.constant 0 : i32
    %c0_i32_1 = arith.constant 0 : i32
    return %c0_i32, %c0_i32_0 : i32, i32
  }
  func.func @transform_8(%arg0: i32, %arg1: i32) -> (i32, i32) {
    %c0_i32 = arith.constant 0 : i32
    %c0_i32_0 = arith.constant 0 : i32
    %c0_i32_1 = arith.constant 0 : i32
    return %c0_i32, %c0_i32_0 : i32, i32
  }
  func.func @transform_9(%arg0: i32, %arg1: i32) -> (i32, i32) {
    %c0_i32 = arith.constant 0 : i32
    %c0_i32_0 = arith.constant 0 : i32
    %c0_i32_1 = arith.constant 0 : i32
    return %c0_i32, %c0_i32_0 : i32, i32
  }
  func.func @transform_10(%arg0: i32, %arg1: i32) -> (i32, i32) {
    %c0_i32 = arith.constant 0 : i32
    %c0_i32_0 = arith.constant 0 : i32
    %c0_i32_1 = arith.constant 0 : i32
    return %c0_i32, %c0_i32_0 : i32, i32
  }
  func.func @transform_11(%arg0: i32, %arg1: i32) -> (i32, i32) {
    %c0_i32 = arith.constant 0 : i32
    %c0_i32_0 = arith.constant 0 : i32
    %c0_i32_1 = arith.constant 0 : i32
    return %c0_i32, %c0_i32_0 : i32, i32
  }
  func.func @transform_12(%arg0: i32, %arg1: i32) -> (i32, i32) {
    %c0_i32 = arith.constant 0 : i32
    %c0_i32_0 = arith.constant 0 : i32
    %c0_i32_1 = arith.constant 0 : i32
    return %c0_i32, %c0_i32_0 : i32, i32
  }
  func.func @transform_13(%arg0: i32, %arg1: i32) -> (i32, i32) {
    %c0_i32 = arith.constant 0 : i32
    %c0_i32_0 = arith.constant 0 : i32
    %c0_i32_1 = arith.constant 0 : i32
    return %c0_i32, %c0_i32_0 : i32, i32
  }
  func.func @transform_14(%arg0: i32, %arg1: i32) -> (i32, i32) {
    %c0_i32 = arith.constant 0 : i32
    %c0_i32_0 = arith.constant 0 : i32
    %c0_i32_1 = arith.constant 0 : i32
    return %c0_i32, %c0_i32_0 : i32, i32
  }
  func.func @transform_15(%arg0: i32, %arg1: i32) -> (i32, i32) {
    %c0_i32 = arith.constant 0 : i32
    %c0_i32_0 = arith.constant 0 : i32
    %c0_i32_1 = arith.constant 0 : i32
    return %c0_i32, %c0_i32_0 : i32, i32
  }
  func.func @transform_16(%arg0: i32, %arg1: i32) -> (i32, i32, i32) {
    %c0_i32 = arith.constant 0 : i32
    %c0_i32_0 = arith.constant 0 : i32
    return %arg0, %arg1, %c0_i32 : i32, i32, i32
  }
}

</mosaic_0001>

<llo_original>
// kernel: tpu_custom_call.1
$region0: #{tpu_custom_call.1}
  #allocation0 [shape = 'u32[]', space=smem, size = 0x4, offset = 0x4, fixed_abs, tag = 'smem constant byte address 0x4 - core index']
  #allocation1 [shape = 'u32[144,128]{1,0:T(1,128)}', space=vmem, size = 0x12000, scoped, tag = 'internal scratch']
  #allocation2 [shape = 'f32[1,1]{1,0:T(1,128)S(6)}', space=smem, size = 0x200, scoped, tag = 'scoped memory for tpu_custom_call.1']
  #allocation3 [shape = 'f32[1,1]{1,0:T(1,128)S(6)}', space=smem, size = 0x200, scoped, tag = 'scoped memory for tpu_custom_call.1']
  #allocation4 [shape = 'f32[1,1]{1,0:T(1,128)S(6)}', space=smem, size = 0x200, scoped, tag = 'scoped memory for tpu_custom_call.1']
  #allocation5 [shape = 'f32[1,1]{1,0:T(1,128)S(6)}', space=smem, size = 0x200, scoped, tag = 'scoped memory for tpu_custom_call.1']
  %s0 = inlined_call_operand.hbm [shape: f32[2,32,128], index: 0, kind: input, shape index: {}]
  %s1 = inlined_call_operand.hbm [shape: f32[2,32,128], index: 1, kind: input, shape index: {}]
  %s2 = inlined_call_operand.hbm [shape: f32[2,32,128], index: 2, kind: input, shape index: {}]
  %s3 = inlined_call_operand.vmem [shape: f32[1,128], index: 3, kind: input, shape index: {}]
  %s4 = inlined_call_operand.vmem [shape: f32[1,128], index: 4, kind: input, shape index: {}]
  %s5 = inlined_call_operand.hbm [shape: bf16[128,256], index: 5, kind: input, shape index: {}]
  %s6 = inlined_call_operand.vmem [shape: f32[7,256], index: 6, kind: input, shape index: {}]
  %s7 = inlined_call_operand.hbm [shape: bf16[256,128], index: 7, kind: input, shape index: {}]
  %s8 = inlined_call_operand.vmem [shape: f32[1,128], index: 8, kind: input, shape index: {}]
  %s9 = inlined_call_operand.vmem [shape: f32[1,128], index: 9, kind: input, shape index: {}]
  %s10 = inlined_call_operand.hbm [shape: bf16[128,512], index: 10, kind: input, shape index: {}]
  %s11 = inlined_call_operand.hbm [shape: bf16[512,128], index: 11, kind: input, shape index: {}]
  %s12 = inlined_call_operand.<no memory space> [shape: f32[1,1], index: 12, kind: input, shape index: {}]
  %s13 = inlined_call_operand.<no memory space> [shape: f32[1,1], index: 13, kind: input, shape index: {}]
  %s14 = inlined_call_operand.<no memory space> [shape: f32[1,1], index: 14, kind: input, shape index: {}]
  %s15 = inlined_call_operand.<no memory space> [shape: f32[1,1], index: 15, kind: input, shape index: {}]
  %s16 = inlined_call_operand.hbm [shape: f32[2,32,128], index: 16, kind: output, shape index: {}]
  %s17 = sld [smem:[#allocation0]]
  $region125: #{tpu_custom_call.1} parent=0
    _
  %s19 = ssub.s32 1, %s17
  %s20 = scalar_select 0, %s19, %s17
  %21 = sst [smem:[#allocation2]] %s12
  %22 = sst [smem:[#allocation3]] %s13
  %23 = sst [smem:[#allocation4]] %s14
  %24 = sst [smem:[#allocation5]] %s15
  $region1: #{tpu_custom_call.1} parent=0
    #allocation6 [shape = 'u8[8192]{0}', space=vmem, size = 0x2000, scoped, tag = 'input window, operand 0']
    #allocation7 [shape = 's32[2]{0}', space=sflag, size = 0x8, scoped, tag = 'scoped memory for tpu_custom_call.1']
    #allocation8 [shape = 's32[2]{0}', space=sflag, size = 0x8, scoped, tag = 'scoped memory for tpu_custom_call.1']
    #allocation9 [shape = 'u8[8192]{0}', space=vmem, size = 0x2000, scoped, tag = 'input window, operand 1']
    #allocation10 [shape = 's32[2]{0}', space=sflag, size = 0x8, scoped, tag = 'scoped memory for tpu_custom_call.1']
    #allocation11 [shape = 'u8[8192]{0}', space=vmem, size = 0x2000, scoped, tag = 'input window, operand 2']
    #allocation12 [shape = 'u8[65536]{0}', space=vmem, size = 0x10000, scoped, tag = 'input window, operand 5, single buffered']
    #allocation13 [shape = 's32[1]{0}', space=sflag, size = 0x4, scoped, tag = 'scoped memory for tpu_custom_call.1']
    #allocation14 [shape = 'u8[65536]{0}', space=vmem, size = 0x10000, scoped, tag = 'input window, operand 7, single buffered']
    #allocation15 [shape = 'u8[131072]{0}', space=vmem, size = 0x20000, scoped, tag = 'input window, operand 10, single buffered']
    #allocation16 [shape = 's32[1]{0}', space=sflag, size = 0x4, scoped, tag = 'scoped memory for tpu_custom_call.1']
    #allocation17 [shape = 'u8[131072]{0}', space=vmem, size = 0x20000, scoped, tag = 'input window, operand 11, single buffered']
    #allocation18 [shape = 'u8[8192]{0}', space=vmem, size = 0x2000, scoped, tag = 'output window, operand 0']
    %25 = vsyncpa [#allocation7], 0
    %s26 = scalar_lea.sflag [#allocation7], 1
    %27 = vsyncpa %s26, 0
    %28 = vsyncpa [#allocation10], 0
    %s29 = scalar_lea.sflag [#allocation10], 1
    %30 = vsyncpa %s29, 0
    %31 = vsyncpa [#allocation13], 0
    %32 = vsyncpa [#allocation16], 0
    %33 = vsyncpa [#allocation8], 0
    %s34 = scalar_lea.sflag [#allocation8], 1
    %35 = vsyncpa %s34, 0
    loop: start=0, step=1, limit=10
    $region2: #{tpu_custom_call.1} parent=1 // loop_pre_header
      _
    $region3: #{tpu_custom_call.1} parent=1 // loop_header
      %s37 = sphi 0, %s41
      %p38 = scmp.ge.s32.totalorder %s37, 10
      %s44 = sphi 0, %s56
      %s45 = sphi 0, %s52
      %s46 = sphi 0, %s44
      %s47 = sphi 0, %s45
      %s48 = sphi 0, %s46
      %s49 = sphi 0, %s47
      %s61 = sphi 0, %s63
      %s64 = sphi 0, %s61
      %s65 = sphi 0, %s64
      %s81 = sphi 0, %s65
      %s95 = sphi 0, %s97
      %s98 = sphi 0, %s95
      %s99 = sphi 0, %s98
      %s115 = sphi 0, %s99
      %s129 = sphi 0, %s131
      %s132 = sphi 0, %s129
      %s133 = sphi 0, %s132
      %s149 = sphi 0, %s133
      %s153 = sphi 0, %s153
      %s155 = sphi 0, %s153
      %s156 = sphi 0, %s155
      %s170 = sphi 0, %s156
      %s174 = sphi 0, %s174
      %s176 = sphi 0, %s174
      %s177 = sphi 0, %s176
      %s191 = sphi 0, %s177
      %s195 = sphi 0, %s195
      %s197 = sphi 0, %s195
      %s198 = sphi 0, %s197
      %s212 = sphi 0, %s198
      %s216 = sphi 0, %s216
      %s218 = sphi 0, %s216
      %s219 = sphi 0, %s218
      %s233 = sphi 0, %s219
      %s237 = sphi 0, %s237
      %s239 = sphi 0, %s237
      %s240 = sphi 0, %s239
      %s254 = sphi 0, %s240
      %s258 = sphi 0, %s258
      %s260 = sphi 0, %s258
      %s261 = sphi 0, %s260
      %s275 = sphi 0, %s261
      %s279 = sphi 0, %s279
      %s281 = sphi 0, %s279
      %s282 = sphi 0, %s281
      %s296 = sphi 0, %s282
      %s300 = sphi 0, %s300
      %s302 = sphi 0, %s300
      %s303 = sphi 0, %s302
      %s317 = sphi 0, %s303
      %s321 = sphi 0, %s321
      %s323 = sphi 0, %s321
      %s324 = sphi 0, %s323
      %s338 = sphi 0, %s324
      %s342 = sphi 0, %s342
      %s344 = sphi 0, %s342
      %s345 = sphi 0, %s344
      %s359 = sphi 0, %s345
      %s363 = sphi 0, %s363
      %s365 = sphi 0, %s363
      %s366 = sphi 0, %s365
      %s380 = sphi 0, %s366
      %s384 = sphi 0, %s384
      %s386 = sphi 0, %s384
      %s387 = sphi 0, %s386
      %s401 = sphi 0, %s387
      %s405 = sphi 0, %s405
      %s407 = sphi 0, %s405
      %s408 = sphi 0, %s407
      %s422 = sphi 0, %s408
      %s430 = sphi 0, %s432
      %s433 = sphi 0, %s430
      %s434 = sphi 0, %s433
      %s450 = sphi 0, %s434
    $region4: #{tpu_custom_call.1} parent=1 // loop_header_branch
      %40 = sbr.rel (%p38) target = $region8
    $region5: #{tpu_custom_call.1} parent=1 // loop_body
      %s42 = ssub.s32 %s37, 1
      %s43 = ssub.s32 %s37, 2
      %s50 = sadd.s32 1, %s45
      %p51 = scmp.ge.s32.totalorder %s50, 4
      %s52 = scalar_select %p51, 0, %s50
      %s53 = sadd.s32 1, %s44
      %s54 = scalar_select %p51, %s53, %s44
      %p55 = scmp.ge.s32.totalorder %s54, 2
      %s56 = scalar_select %p55, 0, %s54
      %s57 = ssub.s32 %s44, %s56
      %s58 = ssub.s32 %s45, %s52
      %s59 = sor.u32 %s57, %s58
      %p60 = scmp.eq.s32.totalorder %s59, 0
      %s62 = sadd.s32 %s61, 1
      %s63 = scalar_select %p60, %s61, %s62
      %p66 = pneg %p60
      %p67 = scmp.eq.s32.totalorder %s37, 7
      %p68 = por %p66, %p67
      %p69 = scmp.ne.s32.totalorder %s61, %s64
      %p70 = scmp.eq.s32.totalorder %s37, 0
      %p71 = por %p69, %p70
      %p72 = scmp.ne.s32.totalorder %s61, %s64
      %p73 = scmp.eq.s32.totalorder %s42, 7
      %p74 = por %p72, %p73
      %p75 = scmp.ne.s32.totalorder %s64, %s65
      %p76 = scmp.eq.s32.totalorder %s42, 0
      %p77 = por %p75, %p76
      %p78 = scmp.ne.s32.totalorder %s64, %s65
      %p79 = scmp.eq.s32.totalorder %s43, 7
      %p80 = por %p78, %p79
      %p82 = scmp.ne.s32.totalorder %s65, %s81
      %p83 = scmp.eq.s32.totalorder %s43, 0
      %p84 = por %p82, %p83
      %s85 = ssub.s32 %s45, 1
      %p86 = scmp.gt.s32.totalorder %s85, 0
      %s87 = scalar_select %p86, %s85, 0
      %s88 = ssub.s32 %s52, 1
      %p89 = scmp.gt.s32.totalorder %s88, 0
      %s90 = scalar_select %p89, %s88, 0
      %s91 = ssub.s32 %s44, %s56
      %s92 = ssub.s32 %s87, %s90
      %s93 = sor.u32 %s91, %s92
      %p94 = scmp.eq.s32.totalorder %s93, 0
      %s96 = sadd.s32 %s95, 1
      %s97 = scalar_select %p94, %s95, %s96
      %p100 = pneg %p94
      %p101 = scmp.eq.s32.totalorder %s37, 7
      %p102 = por %p100, %p101
      %p103 = scmp.ne.s32.totalorder %s95, %s98
      %p104 = scmp.eq.s32.totalorder %s37, 0
      %p105 = por %p103, %p104
      %p106 = scmp.ne.s32.totalorder %s95, %s98
      %p107 = scmp.eq.s32.totalorder %s42, 7
      %p108 = por %p106, %p107
      %p109 = scmp.ne.s32.totalorder %s98, %s99
      %p110 = scmp.eq.s32.totalorder %s42, 0
      %p111 = por %p109, %p110
      %p112 = scmp.ne.s32.totalorder %s98, %s99
      %p113 = scmp.eq.s32.totalorder %s43, 7
      %p114 = por %p112, %p113
      %p116 = scmp.ne.s32.totalorder %s99, %s115
      %p117 = scmp.eq.s32.totalorder %s43, 0
      %p118 = por %p116, %p117
      %s119 = sadd.s32 %s45, 1
      %p120 = scmp.lt.s32.totalorder %s119, 3
      %s121 = scalar_select %p120, %s119, 3
      %s122 = sadd.s32 %s52, 1
      %p123 = scmp.lt.s32.totalorder %s122, 3
      %s124 = scalar_select %p123, %s122, 3
      %s125 = ssub.s32 %s44, %s56
      %s126 = ssub.s32 %s121, %s124
      %s127 = sor.u32 %s125, %s126
      %p128 = scmp.eq.s32.totalorder %s127, 0
      %s130 = sadd.s32 %s129, 1
      %s131 = scalar_select %p128, %s129, %s130
      %p134 = pneg %p128
      %p135 = scmp.eq.s32.totalorder %s37, 7
      %p136 = por %p134, %p135
      %p137 = scmp.ne.s32.totalorder %s129, %s132
      %p138 = scmp.eq.s32.totalorder %s37, 0
      %p139 = por %p137, %p138
      %p140 = scmp.ne.s32.totalorder %s129, %s132
      %p141 = scmp.eq.s32.totalorder %s42, 7
      %p142 = por %p140, %p141
      %p143 = scmp.ne.s32.totalorder %s132, %s133
      %p144 = scmp.eq.s32.totalorder %s42, 0
      %p145 = por %p143, %p144
      %p146 = scmp.ne.s32.totalorder %s132, %s133
      %p147 = scmp.eq.s32.totalorder %s43, 7
      %p148 = por %p146, %p147
      %p150 = scmp.ne.s32.totalorder %s133, %s149
      %p151 = scmp.eq.s32.totalorder %s43, 0
      %p152 = por %p150, %p151
      %s154 = sadd.s32 %s153, 1
      %p157 = scmp.eq.s32.totalorder %s37, 7
      %p158 = scmp.ne.s32.totalorder %s153, %s155
      %p159 = scmp.eq.s32.totalorder %s37, 0
      %p160 = por %p158, %p159
      %p161 = scmp.ne.s32.totalorder %s153, %s155
      %p162 = scmp.eq.s32.totalorder %s42, 7
      %p163 = por %p161, %p162
      %p164 = scmp.ne.s32.totalorder %s155, %s156
      %p165 = scmp.eq.s32.totalorder %s42, 0
      %p166 = por %p164, %p165
      %p167 = scmp.ne.s32.totalorder %s155, %s156
      %p168 = scmp.eq.s32.totalorder %s43, 7
      %p169 = por %p167, %p168
      %p171 = scmp.ne.s32.totalorder %s156, %s170
      %p172 = scmp.eq.s32.totalorder %s43, 0
      %p173 = por %p171, %p172
      %s175 = sadd.s32 %s174, 1
      %p178 = scmp.eq.s32.totalorder %s37, 7
      %p179 = scmp.ne.s32.totalorder %s174, %s176
      %p180 = scmp.eq.s32.totalorder %s37, 0
      %p181 = por %p179, %p180
      %p182 = scmp.ne.s32.totalorder %s174, %s176
      %p183 = scmp.eq.s32.totalorder %s42, 7
      %p184 = por %p182, %p183
      %p185 = scmp.ne.s32.totalorder %s176, %s177
      %p186 = scmp.eq.s32.totalorder %s42, 0
      %p187 = por %p185, %p186
      %p188 = scmp.ne.s32.totalorder %s176, %s177
      %p189 = scmp.eq.s32.totalorder %s43, 7
      %p190 = por %p188, %p189
      %p192 = scmp.ne.s32.totalorder %s177, %s191
      %p193 = scmp.eq.s32.totalorder %s43, 0
      %p194 = por %p192, %p193
      %s196 = sadd.s32 %s195, 1
      %p199 = scmp.eq.s32.totalorder %s37, 7
      %p200 = scmp.ne.s32.totalorder %s195, %s197
      %p201 = scmp.eq.s32.totalorder %s37, 0
      %p202 = por %p200, %p201
      %p203 = scmp.ne.s32.totalorder %s195, %s197
      %p204 = scmp.eq.s32.totalorder %s42, 7
      %p205 = por %p203, %p204
      %p206 = scmp.ne.s32.totalorder %s197, %s198
      %p207 = scmp.eq.s32.totalorder %s42, 0
      %p208 = por %p206, %p207
      %p209 = scmp.ne.s32.totalorder %s197, %s198
      %p210 = scmp.eq.s32.totalorder %s43, 7
      %p211 = por %p209, %p210
      %p213 = scmp.ne.s32.totalorder %s198, %s212
      %p214 = scmp.eq.s32.totalorder %s43, 0
      %p215 = por %p213, %p214
      %s217 = sadd.s32 %s216, 1
      %p220 = scmp.eq.s32.totalorder %s37, 7
      %p221 = scmp.ne.s32.totalorder %s216, %s218
      %p222 = scmp.eq.s32.totalorder %s37, 0
      %p223 = por %p221, %p222
      %p224 = scmp.ne.s32.totalorder %s216, %s218
      %p225 = scmp.eq.s32.totalorder %s42, 7
      %p226 = por %p224, %p225
      %p227 = scmp.ne.s32.totalorder %s218, %s219
      %p228 = scmp.eq.s32.totalorder %s42, 0
      %p229 = por %p227, %p228
      %p230 = scmp.ne.s32.totalorder %s218, %s219
      %p231 = scmp.eq.s32.totalorder %s43, 7
      %p232 = por %p230, %p231
      %p234 = scmp.ne.s32.totalorder %s219, %s233
      %p235 = scmp.eq.s32.totalorder %s43, 0
      %p236 = por %p234, %p235
      %s238 = sadd.s32 %s237, 1
      %p241 = scmp.eq.s32.totalorder %s37, 7
      %p242 = scmp.ne.s32.totalorder %s237, %s239
      %p243 = scmp.eq.s32.totalorder %s37, 0
      %p244 = por %p242, %p243
      %p245 = scmp.ne.s32.totalorder %s237, %s239
      %p246 = scmp.eq.s32.totalorder %s42, 7
      %p247 = por %p245, %p246
      %p248 = scmp.ne.s32.totalorder %s239, %s240
      %p249 = scmp.eq.s32.totalorder %s42, 0
      %p250 = por %p248, %p249
      %p251 = scmp.ne.s32.totalorder %s239, %s240
      %p252 = scmp.eq.s32.totalorder %s43, 7
      %p253 = por %p251, %p252
      %p255 = scmp.ne.s32.totalorder %s240, %s254
      %p256 = scmp.eq.s32.totalorder %s43, 0
      %p257 = por %p255, %p256
      %s259 = sadd.s32 %s258, 1
      %p262 = scmp.eq.s32.totalorder %s37, 7
      %p263 = scmp.ne.s32.totalorder %s258, %s260
      %p264 = scmp.eq.s32.totalorder %s37, 0
      %p265 = por %p263, %p264
      %p266 = scmp.ne.s32.totalorder %s258, %s260
      %p267 = scmp.eq.s32.totalorder %s42, 7
      %p268 = por %p266, %p267
      %p269 = scmp.ne.s32.totalorder %s260, %s261
      %p270 = scmp.eq.s32.totalorder %s42, 0
      %p271 = por %p269, %p270
      %p272 = scmp.ne.s32.totalorder %s260, %s261
      %p273 = scmp.eq.s32.totalorder %s43, 7
      %p274 = por %p272, %p273
      %p276 = scmp.ne.s32.totalorder %s261, %s275
      %p277 = scmp.eq.s32.totalorder %s43, 0
      %p278 = por %p276, %p277
      %s280 = sadd.s32 %s279, 1
      %p283 = scmp.eq.s32.totalorder %s37, 7
      %p284 = scmp.ne.s32.totalorder %s279, %s281
      %p285 = scmp.eq.s32.totalorder %s37, 0
      %p286 = por %p284, %p285
      %p287 = scmp.ne.s32.totalorder %s279, %s281
      %p288 = scmp.eq.s32.totalorder %s42, 7
      %p289 = por %p287, %p288
      %p290 = scmp.ne.s32.totalorder %s281, %s282
      %p291 = scmp.eq.s32.totalorder %s42, 0
      %p292 = por %p290, %p291
      %p293 = scmp.ne.s32.totalorder %s281, %s282
      %p294 = scmp.eq.s32.totalorder %s43, 7
      %p295 = por %p293, %p294
      %p297 = scmp.ne.s32.totalorder %s282, %s296
      %p298 = scmp.eq.s32.totalorder %s43, 0
      %p299 = por %p297, %p298
      %s301 = sadd.s32 %s300, 1
      %p304 = scmp.eq.s32.totalorder %s37, 7
      %p305 = scmp.ne.s32.totalorder %s300, %s302
      %p306 = scmp.eq.s32.totalorder %s37, 0
      %p307 = por %p305, %p306
      %p308 = scmp.ne.s32.totalorder %s300, %s302
      %p309 = scmp.eq.s32.totalorder %s42, 7
      %p310 = por %p308, %p309
      %p311 = scmp.ne.s32.totalorder %s302, %s303
      %p312 = scmp.eq.s32.totalorder %s42, 0
      %p313 = por %p311, %p312
      %p314 = scmp.ne.s32.totalorder %s302, %s303
      %p315 = scmp.eq.s32.totalorder %s43, 7
      %p316 = por %p314, %p315
      %p318 = scmp.ne.s32.totalorder %s303, %s317
      %p319 = scmp.eq.s32.totalorder %s43, 0
      %p320 = por %p318, %p319
      %s322 = sadd.s32 %s321, 1
      %p325 = scmp.eq.s32.totalorder %s37, 7
      %p326 = scmp.ne.s32.totalorder %s321, %s323
      %p327 = scmp.eq.s32.totalorder %s37, 0
      %p328 = por %p326, %p327
      %p329 = scmp.ne.s32.totalorder %s321, %s323
      %p330 = scmp.eq.s32.totalorder %s42, 7
      %p331 = por %p329, %p330
      %p332 = scmp.ne.s32.totalorder %s323, %s324
      %p333 = scmp.eq.s32.totalorder %s42, 0
      %p334 = por %p332, %p333
      %p335 = scmp.ne.s32.totalorder %s323, %s324
      %p336 = scmp.eq.s32.totalorder %s43, 7
      %p337 = por %p335, %p336
      %p339 = scmp.ne.s32.totalorder %s324, %s338
      %p340 = scmp.eq.s32.totalorder %s43, 0
      %p341 = por %p339, %p340
      %s343 = sadd.s32 %s342, 1
      %p346 = scmp.eq.s32.totalorder %s37, 7
      %p347 = scmp.ne.s32.totalorder %s342, %s344
      %p348 = scmp.eq.s32.totalorder %s37, 0
      %p349 = por %p347, %p348
      %p350 = scmp.ne.s32.totalorder %s342, %s344
      %p351 = scmp.eq.s32.totalorder %s42, 7
      %p352 = por %p350, %p351
      %p353 = scmp.ne.s32.totalorder %s344, %s345
      %p354 = scmp.eq.s32.totalorder %s42, 0
      %p355 = por %p353, %p354
      %p356 = scmp.ne.s32.totalorder %s344, %s345
      %p357 = scmp.eq.s32.totalorder %s43, 7
      %p358 = por %p356, %p357
      %p360 = scmp.ne.s32.totalorder %s345, %s359
      %p361 = scmp.eq.s32.totalorder %s43, 0
      %p362 = por %p360, %p361
      %s364 = sadd.s32 %s363, 1
      %p367 = scmp.eq.s32.totalorder %s37, 7
      %p368 = scmp.ne.s32.totalorder %s363, %s365
      %p369 = scmp.eq.s32.totalorder %s37, 0
      %p370 = por %p368, %p369
      %p371 = scmp.ne.s32.totalorder %s363, %s365
      %p372 = scmp.eq.s32.totalorder %s42, 7
      %p373 = por %p371, %p372
      %p374 = scmp.ne.s32.totalorder %s365, %s366
      %p375 = scmp.eq.s32.totalorder %s42, 0
      %p376 = por %p374, %p375
      %p377 = scmp.ne.s32.totalorder %s365, %s366
      %p378 = scmp.eq.s32.totalorder %s43, 7
      %p379 = por %p377, %p378
      %p381 = scmp.ne.s32.totalorder %s366, %s380
      %p382 = scmp.eq.s32.totalorder %s43, 0
      %p383 = por %p381, %p382
      %s385 = sadd.s32 %s384, 1
      %p388 = scmp.eq.s32.totalorder %s37, 7
      %p389 = scmp.ne.s32.totalorder %s384, %s386
      %p390 = scmp.eq.s32.totalorder %s37, 0
      %p391 = por %p389, %p390
      %p392 = scmp.ne.s32.totalorder %s384, %s386
      %p393 = scmp.eq.s32.totalorder %s42, 7
      %p394 = por %p392, %p393
      %p395 = scmp.ne.s32.totalorder %s386, %s387
      %p396 = scmp.eq.s32.totalorder %s42, 0
      %p397 = por %p395, %p396
      %p398 = scmp.ne.s32.totalorder %s386, %s387
      %p399 = scmp.eq.s32.totalorder %s43, 7
      %p400 = por %p398, %p399
      %p402 = scmp.ne.s32.totalorder %s387, %s401
      %p403 = scmp.eq.s32.totalorder %s43, 0
      %p404 = por %p402, %p403
      %s406 = sadd.s32 %s405, 1
      %p409 = scmp.eq.s32.totalorder %s37, 7
      %p410 = scmp.ne.s32.totalorder %s405, %s407
      %p411 = scmp.eq.s32.totalorder %s37, 0
      %p412 = por %p410, %p411
      %p413 = scmp.ne.s32.totalorder %s405, %s407
      %p414 = scmp.eq.s32.totalorder %s42, 7
      %p415 = por %p413, %p414
      %p416 = scmp.ne.s32.totalorder %s407, %s408
      %p417 = scmp.eq.s32.totalorder %s42, 0
      %p418 = por %p416, %p417
      %p419 = scmp.ne.s32.totalorder %s407, %s408
      %p420 = scmp.eq.s32.totalorder %s43, 7
      %p421 = por %p419, %p420
      %p423 = scmp.ne.s32.totalorder %s408, %s422
      %p424 = scmp.eq.s32.totalorder %s43, 0
      %p425 = por %p423, %p424
      %s426 = ssub.s32 %s44, %s56
      %s427 = ssub.s32 %s45, %s52
      %s428 = sor.u32 %s426, %s427
      %p429 = scmp.eq.s32.totalorder %s428, 0
      %s431 = sadd.s32 %s430, 1
      %s432 = scalar_select %p429, %s430, %s431
      %p435 = pneg %p429
      %p436 = scmp.eq.s32.totalorder %s37, 7
      %p437 = por %p435, %p436
      %p438 = scmp.ne.s32.totalorder %s430, %s433
      %p439 = scmp.eq.s32.totalorder %s37, 0
      %p440 = por %p438, %p439
      %p441 = scmp.ne.s32.totalorder %s430, %s433
      %p442 = scmp.eq.s32.totalorder %s42, 7
      %p443 = por %p441, %p442
      %p444 = scmp.ne.s32.totalorder %s433, %s434
      %p445 = scmp.eq.s32.totalorder %s42, 0
      %p446 = por %p444, %p445
      %p447 = scmp.ne.s32.totalorder %s433, %s434
      %p448 = scmp.eq.s32.totalorder %s43, 7
      %p449 = por %p447, %p448
      %p451 = scmp.ne.s32.totalorder %s434, %s450
      %p452 = scmp.eq.s32.totalorder %s43, 0
      %p453 = por %p451, %p452
      %p454 = scmp.le.s32.totalorder 1, %s37
      %p455 = scmp.lt.s32.totalorder %s37, 9
      %p456 = pnand %p454, %p455
      %p457 = pneg %p456
      // Predicated region
      $region9: #{tpu_custom_call.1} parent=5 // pred_check
        _
      $region10: #{tpu_custom_call.1} parent=5 // pred_check_branch
        %459 = sbr.rel (%p456) target = $region12
      $region11: #{tpu_custom_call.1} parent=5 // pred_region
        %s460 = ssub.s32 %s37, 1
        // Predicated region
        $region13: #{tpu_custom_call.1} parent=11 // pred_check
          %p461 = pneg %p166
        $region14: #{tpu_custom_call.1} parent=11 // pred_check_branch
          %463 = sbr.rel (%p461) target = $region16
        $region15: #{tpu_custom_call.1} parent=11 // pred_region
          _
        $region16: #{tpu_custom_call.1} parent=11 // pred_fallthru
          _
        // Predicated region
        $region17: #{tpu_custom_call.1} parent=11 // pred_check
          %p464 = pneg %p187
        $region18: #{tpu_custom_call.1} parent=11 // pred_check_branch
          %466 = sbr.rel (%p464) target = $region20
        $region19: #{tpu_custom_call.1} parent=11 // pred_region
          _
        $region20: #{tpu_custom_call.1} parent=11 // pred_fallthru
          _
        // Predicated region
        $region21: #{tpu_custom_call.1} parent=11 // pred_check
          %p467 = pneg %p208
        $region22: #{tpu_custom_call.1} parent=11 // pred_check_branch
          %469 = sbr.rel (%p467) target = $region24
        $region23: #{tpu_custom_call.1} parent=11 // pred_region
          %s471 = ssub.s32 2048, 2048
          %472 = vsyncadd [#allocation13], %s471
          %s473 = sshll.u32 [#allocation12], 4
          %s474 = int_to_ptr.vmem [resolvable:$true] %s473
          %479 = dma.hbm_to_vmem [thread:$0]  %s5, 2048, %s474, [#allocation13], 128, 128, 8
        $region24: #{tpu_custom_call.1} parent=11 // pred_fallthru
          _
        // Predicated region
        $region25: #{tpu_custom_call.1} parent=11 // pred_check
          %p480 = pneg %p229
        $region26: #{tpu_custom_call.1} parent=11 // pred_check_branch
          %482 = sbr.rel (%p480) target = $region28
        $region27: #{tpu_custom_call.1} parent=11 // pred_region
          _
        $region28: #{tpu_custom_call.1} parent=11 // pred_fallthru
          _
        // Predicated region
        $region29: #{tpu_custom_call.1} parent=11 // pred_check
          %p483 = pneg %p250
        $region30: #{tpu_custom_call.1} parent=11 // pred_check_branch
          %485 = sbr.rel (%p483) target = $region32
        $region31: #{tpu_custom_call.1} parent=11 // pred_region
          %s487 = ssub.s32 2048, 2048
          %488 = vsyncadd [#allocation13], %s487
          %s489 = sshll.u32 [#allocation14], 4
          %s490 = int_to_ptr.vmem [resolvable:$true] %s489
          %495 = dma.hbm_to_vmem [thread:$0]  %s7, 2048, %s490, [#allocation13], 64, 64, 4
        $region32: #{tpu_custom_call.1} parent=11 // pred_fallthru
          _
        // Predicated region
        $region33: #{tpu_custom_call.1} parent=11 // pred_check
          %p496 = pneg %p271
        $region34: #{tpu_custom_call.1} parent=11 // pred_check_branch
          %498 = sbr.rel (%p496) target = $region36
        $region35: #{tpu_custom_call.1} parent=11 // pred_region
          _
        $region36: #{tpu_custom_call.1} parent=11 // pred_fallthru
          _
        // Predicated region
        $region37: #{tpu_custom_call.1} parent=11 // pred_check
          %p499 = pneg %p292
        $region38: #{tpu_custom_call.1} parent=11 // pred_check_branch
          %501 = sbr.rel (%p499) target = $region40
        $region39: #{tpu_custom_call.1} parent=11 // pred_region
          _
        $region40: #{tpu_custom_call.1} parent=11 // pred_fallthru
          _
        // Predicated region
        $region41: #{tpu_custom_call.1} parent=11 // pred_check
          %p502 = pneg %p313
        $region42: #{tpu_custom_call.1} parent=11 // pred_check_branch
          %504 = sbr.rel (%p502) target = $region44
        $region43: #{tpu_custom_call.1} parent=11 // pred_region
          %s506 = ssub.s32 4096, 4096
          %507 = vsyncadd [#allocation16], %s506
          %s508 = sshll.u32 [#allocation15], 4
          %s509 = int_to_ptr.vmem [resolvable:$true] %s508
          %514 = dma.hbm_to_vmem [thread:$0]  %s10, 4096, %s509, [#allocation16], 256, 256, 16
        $region44: #{tpu_custom_call.1} parent=11 // pred_fallthru
          _
        // Predicated region
        $region45: #{tpu_custom_call.1} parent=11 // pred_check
          %p515 = pneg %p334
        $region46: #{tpu_custom_call.1} parent=11 // pred_check_branch
          %517 = sbr.rel (%p515) target = $region48
        $region47: #{tpu_custom_call.1} parent=11 // pred_region
          %s519 = ssub.s32 4096, 4096
          %520 = vsyncadd [#allocation16], %s519
          %s521 = sshll.u32 [#allocation17], 4
          %s522 = int_to_ptr.vmem [resolvable:$true] %s521
          %527 = dma.hbm_to_vmem [thread:$0]  %s11, 4096, %s522, [#allocation16], 64, 64, 4
        $region48: #{tpu_custom_call.1} parent=11 // pred_fallthru
          _
        // Predicated region
        $region49: #{tpu_custom_call.1} parent=11 // pred_check
          %p528 = pneg %p355
        $region50: #{tpu_custom_call.1} parent=11 // pred_check_branch
          %530 = sbr.rel (%p528) target = $region52
        $region51: #{tpu_custom_call.1} parent=11 // pred_region
          _
        $region52: #{tpu_custom_call.1} parent=11 // pred_fallthru
          _
        // Predicated region
        $region53: #{tpu_custom_call.1} parent=11 // pred_check
          %p531 = pneg %p376
        $region54: #{tpu_custom_call.1} parent=11 // pred_check_branch
          %533 = sbr.rel (%p531) target = $region56
        $region55: #{tpu_custom_call.1} parent=11 // pred_region
          _
        $region56: #{tpu_custom_call.1} parent=11 // pred_fallthru
          _
        // Predicated region
        $region57: #{tpu_custom_call.1} parent=11 // pred_check
          %p534 = pneg %p397
        $region58: #{tpu_custom_call.1} parent=11 // pred_check_branch
          %536 = sbr.rel (%p534) target = $region60
        $region59: #{tpu_custom_call.1} parent=11 // pred_region
          _
        $region60: #{tpu_custom_call.1} parent=11 // pred_fallthru
          _
        // Predicated region
        $region61: #{tpu_custom_call.1} parent=11 // pred_check
          %p537 = pneg %p418
        $region62: #{tpu_custom_call.1} parent=11 // pred_check_branch
          %539 = sbr.rel (%p537) target = $region64
        $region63: #{tpu_custom_call.1} parent=11 // pred_region
          _
        $region64: #{tpu_custom_call.1} parent=11 // pred_fallthru
          _
      $region12: #{tpu_custom_call.1} parent=5 // pred_fallthru
        _
      %p540 = scmp.lt.s32.totalorder %s37, 8
      // Predicated region
      $region65: #{tpu_custom_call.1} parent=5 // pred_check
        %p541 = pneg %p540
      $region66: #{tpu_custom_call.1} parent=5 // pred_check_branch
        %543 = sbr.rel (%p541) target = $region68
      $region67: #{tpu_custom_call.1} parent=5 // pred_region
        // Predicated region
        $region69: #{tpu_custom_call.1} parent=67 // pred_check
          %p544 = pneg %p71
        $region70: #{tpu_custom_call.1} parent=67 // pred_check_branch
          %546 = sbr.rel (%p544) target = $region72
        $region71: #{tpu_custom_call.1} parent=67 // pred_region
          %s547 = sand.u32 %s61, 1
          %s548 = scalar_lea.sflag [#allocation7], %s547
          %s549 = sand.u32 %s61, 1
          %s550 = smul.addr %s549, 8
          %s551 = scalar_lea.vmem [#allocation6], %s550
          %s553 = ssub.s32 128, 128
          %554 = vsyncadd %s548, %s553
          %s555 = smul.addr %s44, 4
          %s556 = sadd.s32 %s45, %s555
          %s557 = smul.addr %s556, 128
          %s558 = scalar_lea.hbm %s0, %s557
          %s560 = sshll.u32 %s551, 4
          %s561 = int_to_ptr.vmem [resolvable:$true] %s560
          %563 = dma.hbm_to_vmem [thread:$0]  %s558, 128, %s561, %s548
        $region72: #{tpu_custom_call.1} parent=67 // pred_fallthru
          _
        // Predicated region
        $region73: #{tpu_custom_call.1} parent=67 // pred_check
          %p564 = pneg %p105
        $region74: #{tpu_custom_call.1} parent=67 // pred_check_branch
          %566 = sbr.rel (%p564) target = $region76
        $region75: #{tpu_custom_call.1} parent=67 // pred_region
          %s567 = sand.u32 %s37, 1
          %s568 = scalar_lea.sflag [#allocation10], %s567
          %s569 = sand.u32 %s95, 1
          %s570 = smul.addr %s569, 8
          %s571 = scalar_lea.vmem [#allocation9], %s570
          %s572 = ssub.s32 %s45, 1
          %p573 = scmp.gt.s32.totalorder %s572, 0
          %s574 = scalar_select %p573, %s572, 0
          %s576 = ssub.s32 128, 128
          %577 = vsyncadd %s568, %s576
          %s578 = smul.addr %s44, 4
          %s579 = sadd.s32 %s574, %s578
          %s580 = smul.addr %s579, 128
          %s581 = scalar_lea.hbm %s1, %s580
          %s583 = sshll.u32 %s571, 4
          %s584 = int_to_ptr.vmem [resolvable:$true] %s583
          %586 = dma.hbm_to_vmem [thread:$0]  %s581, 128, %s584, %s568
        $region76: #{tpu_custom_call.1} parent=67 // pred_fallthru
          _
        // Predicated region
        $region77: #{tpu_custom_call.1} parent=67 // pred_check
          %p587 = pneg %p139
        $region78: #{tpu_custom_call.1} parent=67 // pred_check_branch
          %589 = sbr.rel (%p587) target = $region80
        $region79: #{tpu_custom_call.1} parent=67 // pred_region
          %s590 = sand.u32 %s37, 1
          %s591 = scalar_lea.sflag [#allocation10], %s590
          %s592 = sand.u32 %s129, 1
          %s593 = smul.addr %s592, 8
          %s594 = scalar_lea.vmem [#allocation11], %s593
          %s595 = sadd.s32 %s45, 1
          %p596 = scmp.lt.s32.totalorder %s595, 3
          %s597 = scalar_select %p596, %s595, 3
          %s599 = ssub.s32 128, 128
          %600 = vsyncadd %s591, %s599
          %s601 = smul.addr %s44, 4
          %s602 = sadd.s32 %s597, %s601
          %s603 = smul.addr %s602, 128
          %s604 = scalar_lea.hbm %s2, %s603
          %s606 = sshll.u32 %s594, 4
          %s607 = int_to_ptr.vmem [resolvable:$true] %s606
          %609 = dma.hbm_to_vmem [thread:$0]  %s604, 128, %s607, %s591
        $region80: #{tpu_custom_call.1} parent=67 // pred_fallthru
          _
      $region68: #{tpu_custom_call.1} parent=5 // pred_fallthru
        _
      %p610 = scmp.le.s32.totalorder 1, %s37
      %p611 = scmp.lt.s32.totalorder %s37, 9
      %p612 = pnand %p610, %p611
      %p613 = pneg %p612
      // Predicated region
      $region81: #{tpu_custom_call.1} parent=5 // pred_check
        _
      $region82: #{tpu_custom_call.1} parent=5 // pred_check_branch
        %615 = sbr.rel (%p612) target = $region84
      $region83: #{tpu_custom_call.1} parent=5 // pred_region
        %s616 = ssub.s32 %s37, 1
        %s617 = sand.u32 %s64, 1
        %s618 = scalar_lea.sflag [#allocation7], %s617
        %s619 = sand.u32 %s64, 1
        %s620 = smul.addr %s619, 8
        %s621 = scalar_lea.vmem [#allocation6], %s620
        // Predicated region
        $region85: #{tpu_custom_call.1} parent=83 // pred_check
          %p622 = pneg %p77
        $region86: #{tpu_custom_call.1} parent=83 // pred_check_branch
          %624 = sbr.rel (%p622) target = $region88
        $region87: #{tpu_custom_call.1} parent=83 // pred_region
          %625 = dma.done %s618, 128
        $region88: #{tpu_custom_call.1} parent=83 // pred_fallthru
          _
        %s626 = sand.u32 %s42, 1
        %s627 = scalar_lea.sflag [#allocation10], %s626
        %s628 = sand.u32 %s98, 1
        %s629 = smul.addr %s628, 8
        %s630 = scalar_lea.vmem [#allocation9], %s629
        // Predicated region
        $region89: #{tpu_custom_call.1} parent=83 // pred_check
          %p631 = pneg %p111
        $region90: #{tpu_custom_call.1} parent=83 // pred_check_branch
          %633 = sbr.rel (%p631) target = $region92
        $region91: #{tpu_custom_call.1} parent=83 // pred_region
          %634 = dma.done %s627, 128
        $region92: #{tpu_custom_call.1} parent=83 // pred_fallthru
          _
        %s635 = sand.u32 %s42, 1
        %s636 = scalar_lea.sflag [#allocation10], %s635
        %s637 = sand.u32 %s132, 1
        %s638 = smul.addr %s637, 8
        %s639 = scalar_lea.vmem [#allocation11], %s638
        // Predicated region
        $region93: #{tpu_custom_call.1} parent=83 // pred_check
          %p640 = pneg %p145
        $region94: #{tpu_custom_call.1} parent=83 // pred_check_branch
          %642 = sbr.rel (%p640) target = $region96
        $region95: #{tpu_custom_call.1} parent=83 // pred_region
          %643 = dma.done %s636, 128
        $region96: #{tpu_custom_call.1} parent=83 // pred_fallthru
          _
        // Predicated region
        $region97: #{tpu_custom_call.1} parent=83 // pred_check
          %p644 = pneg %p208
        $region98: #{tpu_custom_call.1} parent=83 // pred_check_branch
          %646 = sbr.rel (%p644) target = $region100
        $region99: #{tpu_custom_call.1} parent=83 // pred_region
          %647 = dma.done [#allocation13], 2048
        $region100: #{tpu_custom_call.1} parent=83 // pred_fallthru
          _
        // Predicated region
        $region101: #{tpu_custom_call.1} parent=83 // pred_check
          %p648 = pneg %p250
        $region102: #{tpu_custom_call.1} parent=83 // pred_check_branch
          %650 = sbr.rel (%p648) target = $region104
        $region103: #{tpu_custom_call.1} parent=83 // pred_region
          %651 = dma.done [#allocation13], 2048
        $region104: #{tpu_custom_call.1} parent=83 // pred_fallthru
          _
        // Predicated region
        $region105: #{tpu_custom_call.1} parent=83 // pred_check
          %p652 = pneg %p313
        $region106: #{tpu_custom_call.1} parent=83 // pred_check_branch
          %654 = sbr.rel (%p652) target = $region108
        $region107: #{tpu_custom_call.1} parent=83 // pred_region
          %655 = dma.done [#allocation16], 4096
        $region108: #{tpu_custom_call.1} parent=83 // pred_fallthru
          _
        // Predicated region
        $region109: #{tpu_custom_call.1} parent=83 // pred_check
          %p656 = pneg %p334
        $region110: #{tpu_custom_call.1} parent=83 // pred_check_branch
          %658 = sbr.rel (%p656) target = $region112
        $region111: #{tpu_custom_call.1} parent=83 // pred_region
          %659 = dma.done [#allocation16], 4096
        $region112: #{tpu_custom_call.1} parent=83 // pred_fallthru
          _
        %s660 = sand.u32 %s64, 1
        %s661 = scalar_lea.sflag [#allocation7], %s660
        %s662 = sand.u32 %s64, 1
        %s663 = smul.addr %s662, 8
        %s664 = scalar_lea.vmem [#allocation6], %s663
        %p665 = pneg %p77
        %p666 = pneg %p74
        %s667 = sand.u32 %s42, 1
        %s668 = scalar_lea.sflag [#allocation10], %s667
        %s669 = sand.u32 %s98, 1
        %s670 = smul.addr %s669, 8
        %s671 = scalar_lea.vmem [#allocation9], %s670
        %p672 = pneg %p111
        %p673 = pneg %p108
        %s674 = sand.u32 %s42, 1
        %s675 = scalar_lea.sflag [#allocation10], %s674
        %s676 = sand.u32 %s132, 1
        %s677 = smul.addr %s676, 8
        %s678 = scalar_lea.vmem [#allocation11], %s677
        %p679 = pneg %p145
        %p680 = pneg %p142
        %p681 = pneg %p166
        %p682 = pneg %p163
        %p683 = pneg %p187
        %p684 = pneg %p184
        %p685 = pneg %p208
        %p686 = pneg %p205
        %p687 = pneg %p229
        %p688 = pneg %p226
        %p689 = pneg %p250
        %p690 = pneg %p247
        %p691 = pneg %p271
        %p692 = pneg %p268
        %p693 = pneg %p292
        %p694 = pneg %p289
        %p695 = pneg %p313
        %p696 = pneg %p310
        %p697 = pneg %p334
        %p698 = pneg %p331
        %p699 = pneg %p355
        %p700 = pneg %p352
        %p701 = pneg %p376
        %p702 = pneg %p373
        %p703 = pneg %p397
        %p704 = pneg %p394
        %p705 = pneg %p418
        %p706 = pneg %p415
        %p707 = pneg %p446
        %p708 = pneg %p443
        %s709 = sand.u32 %s433, 1
        %s710 = scalar_lea.sflag [#allocation8], %s709
        %s711 = sand.u32 %s433, 1
        %s712 = smul.addr %s711, 8
        %s713 = scalar_lea.vmem [#allocation18], %s712
        %s714 = ssub.s32 %s47, 1
        %p715 = scmp.gt.s32.totalorder %s714, 0
        %s716 = scalar_select %p715, %s714, 0
        %s717 = sadd.s32 %s47, 1
        %p718 = scmp.lt.s32.totalorder %s717, 3
        %s719 = scalar_select %p718, %s717, 3
        %v721 = vld [vmem:[%s621] sm:$0xff]
        %v722 = vld [vmem:[%s630] sm:$0xff]
        %v723 = vld [vmem:[%s639] sm:$0xff]
        %v724 = vld [vmem:[%s3] sm:$0x1]
        %v725 = vld [vmem:[%s4] sm:$0x1]
        %726 = vadd.xlane.f32.xlu0 %v722
        %v727 = vpop.xlane.xlu0 %726
        %728 = vadd.xlane.f32.xlu0 %v721
        %v729 = vpop.xlane.xlu0 %728
        %730 = vadd.xlane.f32.xlu0 %v723
        %v731 = vpop.xlane.xlu0 %730
        %v732 = vrcp.pop 128.0
        %v733 = vmul.f32 %v727, %v732
        %v734 = vmul.f32 %v729, %v732
        %v735 = vmul.f32 %v731, %v732
        %v736 = vsub.f32 %v722, %v733
        %v737 = vsub.f32 %v721, %v734
        %v738 = vsub.f32 %v723, %v735
        %v739 = vmul.f32 %v736, %v736
        %v740 = vmul.f32 %v737, %v737
        %v741 = vmul.f32 %v738, %v738
        %742 = vadd.xlane.f32.xlu0 %v739
        %v743 = vpop.xlane.xlu0 %742
        %744 = vadd.xlane.f32.xlu0 %v740
        %v745 = vpop.xlane.xlu0 %744
        %746 = vadd.xlane.f32.xlu0 %v741
        %v747 = vpop.xlane.xlu0 %746
        %v748 = vmul.f32 %v743, %v732
        %v749 = vmul.f32 %v745, %v732
        %v750 = vmul.f32 %v747, %v732
        %v751 = vadd.f32 %v748, 1e-05
        %v752 = vadd.f32 %v749, 1e-05
        %v753 = vadd.f32 %v750, 1e-05
        %v754 = vrsqrt.pop %v751
        %v755 = vrsqrt.pop %v752
        %v756 = vrsqrt.pop %v753
        %v757 = vmul.f32 %v736, %v754
        %v758 = vmul.f32 %v737, %v755
        %v759 = vmul.f32 %v738, %v756
        %v761 = vlaneseq
        %v762 = vshrl.u32 %v761, 7
        %v763 = vsub.s32 0, %v762
        %v764 = vrot.slane %v724, %v763
        %v766 = vmul.f32 %v757, %v764
        %v767 = vmul.f32 %v758, %v764
        %v768 = vmul.f32 %v759, %v764
        %v770 = vlaneseq
        %v771 = vshrl.u32 %v770, 7
        %v772 = vsub.s32 0, %v771
        %v773 = vrot.slane %v725, %v772
        %v775 = vadd.f32 %v766, %v773
        %v776 = vadd.f32 %v767, %v773
        %v777 = vadd.f32 %v768, %v773
        %v778 = vpack.c.bf16 %v776, %v775
        %v779 = vpack.c.bf16 %v777, %v777
        %v780 = vld [vmem:[#allocation12] sm:$0xff]
        %v781 = vld [vmem:[#allocation12 + $0x8] sm:$0xff]
        %v782 = vld [vmem:[#allocation12 + $0x10] sm:$0xff]
        %v783 = vld [vmem:[#allocation12 + $0x18] sm:$0xff]
        %v784 = vld [vmem:[#allocation12 + $0x20] sm:$0xff]
        %v785 = vld [vmem:[#allocation12 + $0x28] sm:$0xff]
        %v786 = vld [vmem:[#allocation12 + $0x30] sm:$0xff]
        %v787 = vld [vmem:[#allocation12 + $0x38] sm:$0xff]
        %v788 = vld [vmem:[#allocation12 + $0x40] sm:$0xff]
        %v789 = vld [vmem:[#allocation12 + $0x48] sm:$0xff]
        %v790 = vld [vmem:[#allocation12 + $0x50] sm:$0xff]
        %v791 = vld [vmem:[#allocation12 + $0x58] sm:$0xff]
        %v792 = vld [vmem:[#allocation12 + $0x60] sm:$0xff]
        %v793 = vld [vmem:[#allocation12 + $0x68] sm:$0xff]
        %v794 = vld [vmem:[#allocation12 + $0x70] sm:$0xff]
        %v795 = vld [vmem:[#allocation12 + $0x78] sm:$0xff]
        %v812 = vunpack.c.l.b16 %v780
        %v813 = vunpack.c.h.b16 %v780
        %v814 = vunpack.c.l.b16 %v781
        %v815 = vunpack.c.h.b16 %v781
        %v816 = vunpack.c.l.b16 %v782
        %v817 = vunpack.c.h.b16 %v782
        %v818 = vunpack.c.l.b16 %v783
        %v819 = vunpack.c.h.b16 %v783
        %v820 = vunpack.c.l.b16 %v784
        %v821 = vunpack.c.h.b16 %v784
        %v822 = vunpack.c.l.b16 %v785
        %v823 = vunpack.c.h.b16 %v785
        %v824 = vunpack.c.l.b16 %v786
        %v825 = vunpack.c.h.b16 %v786
        %v826 = vunpack.c.l.b16 %v787
        %v827 = vunpack.c.h.b16 %v787
        %v828 = vunpack.c.l.b16 %v788
        %v829 = vunpack.c.h.b16 %v788
        %v830 = vunpack.c.l.b16 %v789
        %v831 = vunpack.c.h.b16 %v789
        %v832 = vunpack.c.l.b16 %v790
        %v833 = vunpack.c.h.b16 %v790
        %v834 = vunpack.c.l.b16 %v791
        %v835 = vunpack.c.h.b16 %v791
        %v836 = vunpack.c.l.b16 %v792
        %v837 = vunpack.c.h.b16 %v792
        %v838 = vunpack.c.l.b16 %v793
        %v839 = vunpack.c.h.b16 %v793
        %v840 = vunpack.c.l.b16 %v794
        %v841 = vunpack.c.h.b16 %v794
        %v842 = vunpack.c.l.b16 %v795
        %v843 = vunpack.c.h.b16 %v795
        %v844 = vpack.c.b16 %v814, %v812
        %v845 = vpack.c.b16 %v815, %v813
        %v846 = vpack.c.b16 %v818, %v816
        %v847 = vpack.c.b16 %v819, %v817
        %v848 = vpack.c.b16 %v822, %v820
        %v849 = vpack.c.b16 %v823, %v821
        %v850 = vpack.c.b16 %v826, %v824
        %v851 = vpack.c.b16 %v827, %v825
        %v852 = vpack.c.b16 %v830, %v828
        %v853 = vpack.c.b16 %v831, %v829
        %v854 = vpack.c.b16 %v834, %v832
        %v855 = vpack.c.b16 %v835, %v833
        %v856 = vpack.c.b16 %v838, %v836
        %v857 = vpack.c.b16 %v839, %v837
        %v858 = vpack.c.b16 %v842, %v840
        %v859 = vpack.c.b16 %v843, %v841
        %876 = vmatprep.subr.bf16.mxu0 %v845
        %877 = vmatpush1.bf16.msra.mxu0 %v844
        %878 = vmatprep.subr.bf16.mxu0 %v847
        %879 = vmatpush1.bf16.msra.mxu0 %v846
        %880 = vmatprep.subr.bf16.mxu0 %v849
        %881 = vmatpush1.bf16.msra.mxu0 %v848
        %882 = vmatprep.subr.bf16.mxu0 %v851
        %883 = vmatpush1.bf16.msra.mxu0 %v850
        %884 = vmatprep.subr.bf16.mxu0 %v853
        %885 = vmatpush1.bf16.msra.mxu0 %v852
        %886 = vmatprep.subr.bf16.mxu0 %v855
        %887 = vmatpush1.bf16.msra.mxu0 %v854
        %888 = vmatprep.subr.bf16.mxu0 %v857
        %889 = vmatpush1.bf16.msra.mxu0 %v856
        %890 = vmatprep.subr.bf16.mxu0 %v859
        %891 = vmatpush1.bf16.msra.mxu0 %v858
        %892 = vmatprep.subr.bf16.mxu0 0
        %893 = vmatpush1.bf16.msra.mxu0 0
        %894 = vmatprep.subr.bf16.mxu0 0
        %895 = vmatpush1.bf16.msra.mxu0 0
        %896 = vmatprep.subr.bf16.mxu0 0
        %897 = vmatpush1.bf16.msra.mxu0 0
        %898 = vmatprep.subr.bf16.mxu0 0
        %899 = vmatpush1.bf16.msra.mxu0 0
        %900 = vmatprep.subr.bf16.mxu0 0
        %901 = vmatpush1.bf16.msra.mxu0 0
        %902 = vmatprep.subr.bf16.mxu0 0
        %903 = vmatpush1.bf16.msra.mxu0 0
        %904 = vmatprep.subr.bf16.mxu0 0
        %905 = vmatpush1.bf16.msra.mxu0 0
        %906 = vmatprep.subr.bf16.mxu0 0
        %907 = vmatpush1.bf16.msra.mxu0 0
        %908 = vmatprep.mubr.bf16.mxu0 0
        %909 = vmatmul.mubr.bf16.gmra.mrb[0].mxu0 %v778
        %v910 = vpop.f32.mrb[0].mxu0
        %v911 = vadd.f32 0.0, %v910
        %v912 = vpop.f32.mrb[0].mxu0
        %v913 = vadd.f32 0.0, %v912
        %v914 = vpop.f32.mrb[0].mxu0
        %v915 = vadd.f32 0.0, %v914
        %v916 = vpop.f32.mrb[0].mxu0
        %v917 = vadd.f32 0.0, %v916
        %918 = vmatprep.mubr.bf16.mxu0 0
        %919 = vmatmul.mubr.bf16.gmra.mrb[0].mxu0 %v779
        %v920 = vpop.f32.mrb[0].mxu0
        %v921 = vadd.f32 0.0, %v920
        %v922 = vpop.f32.mrb[0].mxu0
        %v923 = vadd.f32 0.0, %v922
        %v924 = vpop.f32.mrb[0].mxu0
        %v925 = vpop.f32.mrb[0].mxu0
        %926 = vdwg.mxu0
        %s927 = sld [smem:[#allocation2]]
        %s928 = sld [smem:[#allocation3]]
        %v929 = vmax.f32 %v911, 0.0
        %v930 = vmax.f32 %v913, 0.0
        %v931 = vmax.f32 %v915, 0.0
        %v932 = vmax.f32 %v917, 0.0
        %v933 = vmax.f32 %v921, 0.0
        %v934 = vmax.f32 %v923, 0.0
        %v935 = vstv %s927
        %v936 = vmul.f32 %v935, %v929
        %v937 = vmul.f32 %v935, %v930
        %v938 = vmul.f32 %v935, %v931
        %v939 = vmul.f32 %v935, %v932
        %v940 = vmul.f32 %v935, %v933
        %v941 = vmul.f32 %v935, %v934
        %v942 = vmul.f32 %v936, %v929
        %v943 = vmul.f32 %v937, %v930
        %v944 = vmul.f32 %v938, %v931
        %v945 = vmul.f32 %v939, %v932
        %v946 = vmul.f32 %v940, %v933
        %v947 = vmul.f32 %v941, %v934
        %v948 = vstv %s928
        %v949 = vadd.f32 %v942, %v948
        %v950 = vadd.f32 %v943, %v948
        %v951 = vadd.f32 %v944, %v948
        %v952 = vadd.f32 %v945, %v948
        %v953 = vadd.f32 %v946, %v948
        %v954 = vadd.f32 %v947, %v948
        %v955 = vlaneseq
        %v956 = vshrl.u32 %v955, 7
        %v957 = vadd.s32 %v956, 8
        %v958 = vadd.s32 %v956, 16
        %s959 = smul.u32 %s47, 8
        %v960 = vstv %s959
        %v961 = vadd.s32 %v960, %v956
        %v962 = vadd.s32 %v960, %v957
        %v963 = vadd.s32 %v960, %v958
        %v964 = vsub.s32 %v961, 8
        %v965 = vsub.s32 %v962, 8
        %v966 = vsub.s32 %v963, 8
        %vm967 = vcmp.ge.s32.totalorder %v964, 0
        %vm968 = vcmp.ge.s32.totalorder %v965, 0
        %vm969 = vcmp.ge.s32.totalorder %v966, 0
        %vm970 = vcmp.lt.s32.totalorder %v964, 32
        %vm971 = vcmp.lt.s32.totalorder %v965, 32
        %vm972 = vcmp.lt.s32.totalorder %v966, 32
        %vm973 = vmand %vm967, %vm970
        %vm974 = vmand %vm968, %vm971
        %vm975 = vmand %vm969, %vm972
        %v976 = vsel %vm973, 1, 0
        %v977 = vsel %vm974, 1, 0
        %v978 = vsel %vm975, 1, 0
        %vm979 = vcmp.eq.s32.totalorder %v976, 1
        %vm980 = vcmp.eq.s32.totalorder %v977, 1
        %vm981 = vcmp.eq.s32.totalorder %v978, 1
        %v982 = vsel %vm979, %v949, 0.0
        %v983 = vsel %vm979, %v950, 0.0
        %v984 = vsel %vm980, %v951, 0.0
        %v985 = vsel %vm980, %v952, 0.0
        %v986 = vsel %vm981, %v953, 0.0
        %v987 = vsel %vm981, %v954, 0.0
        %v988 = vld [vmem:[%s6] sm:$0x7f]
        %v989 = vld [vmem:[%s6 + $0x8] sm:$0x7f]
        %v990 = vrot.slane %v982, 5
        %v991 = vrot.slane %v983, 5
        %v992 = vrot.slane %v984, 5
        %v993 = vrot.slane %v985, 5
        %vm994 = vcmp.lt.s32.totalorder %v956, 3
        %v995 = vsel %vm994, %v990, %v992
        %v996 = vsel %vm994, %v991, %v993
        %v997 = vlaneseq
        %v998 = vshrl.u32 %v997, 7
        %v999 = vsub.s32 0, %v998
        %v1000 = vrot.slane %v988, %v999
        %v1001 = vlaneseq
        %v1002 = vshrl.u32 %v1001, 7
        %v1003 = vsub.s32 0, %v1002
        %v1004 = vrot.slane %v989, %v1003
        %v1005 = vmul.f32 %v1000, %v995
        %v1006 = vmul.f32 %v1004, %v996
        %v1007 = vrot.slane %v982, 6
        %v1008 = vrot.slane %v983, 6
        %v1009 = vrot.slane %v984, 6
        %v1010 = vrot.slane %v985, 6
        %vm1011 = vcmp.lt.s32.totalorder %v956, 2
        %v1012 = vsel %vm1011, %v1007, %v1009
        %v1013 = vsel %vm1011, %v1008, %v1010
        %v1014 = vlaneseq
        %v1015 = vshrl.u32 %v1014, 7
        %v1016 = vsub.s32 1, %v1015
        %v1017 = vrot.slane %v988, %v1016
        %v1018 = vlaneseq
        %v1019 = vshrl.u32 %v1018, 7
        %v1020 = vsub.s32 1, %v1019
        %v1021 = vrot.slane %v989, %v1020
        %v1022 = vmul.f32 %v1017, %v1012
        %v1023 = vmul.f32 %v1021, %v1013
        %v1024 = vadd.f32 %v1005, %v1022
        %v1025 = vadd.f32 %v1006, %v1023
        %v1026 = vrot.slane %v982, 7
        %v1027 = vrot.slane %v983, 7
        %v1028 = vrot.slane %v984, 7
        %v1029 = vrot.slane %v985, 7
        %vm1030 = vcmp.lt.s32.totalorder %v956, 1
        %v1031 = vsel %vm1030, %v1026, %v1028
        %v1032 = vsel %vm1030, %v1027, %v1029
        %v1033 = vlaneseq
        %v1034 = vshrl.u32 %v1033, 7
        %v1035 = vsub.s32 2, %v1034
        %v1036 = vrot.slane %v988, %v1035
        %v1037 = vlaneseq
        %v1038 = vshrl.u32 %v1037, 7
        %v1039 = vsub.s32 2, %v1038
        %v1040 = vrot.slane %v989, %v1039
        %v1041 = vmul.f32 %v1036, %v1031
        %v1042 = vmul.f32 %v1040, %v1032
        %v1043 = vadd.f32 %v1024, %v1041
        %v1044 = vadd.f32 %v1025, %v1042
        %v1045 = vlaneseq
        %v1046 = vshrl.u32 %v1045, 7
        %v1047 = vsub.s32 3, %v1046
        %v1048 = vrot.slane %v988, %v1047
        %v1049 = vlaneseq
        %v1050 = vshrl.u32 %v1049, 7
        %v1051 = vsub.s32 3, %v1050
        %v1052 = vrot.slane %v989, %v1051
        %v1053 = vmul.f32 %v1048, %v984
        %v1054 = vmul.f32 %v1052, %v985
        %v1055 = vadd.f32 %v1043, %v1053
        %v1056 = vadd.f32 %v1044, %v1054
        %v1057 = vrot.slane %v984, 1
        %v1058 = vrot.slane %v985, 1
        %v1059 = vrot.slane %v986, 1
        %v1060 = vrot.slane %v987, 1
        %vm1061 = vcmp.lt.s32.totalorder %v956, 7
        %v1062 = vsel %vm1061, %v1057, %v1059
        %v1063 = vsel %vm1061, %v1058, %v1060
        %v1064 = vlaneseq
        %v1065 = vshrl.u32 %v1064, 7
        %v1066 = vsub.s32 4, %v1065
        %v1067 = vrot.slane %v988, %v1066
        %v1068 = vlaneseq
        %v1069 = vshrl.u32 %v1068, 7
        %v1070 = vsub.s32 4, %v1069
        %v1071 = vrot.slane %v989, %v1070
        %v1072 = vmul.f32 %v1067, %v1062
        %v1073 = vmul.f32 %v1071, %v1063
        %v1074 = vadd.f32 %v1055, %v1072
        %v1075 = vadd.f32 %v1056, %v1073
        %v1076 = vrot.slane %v984, 2
        %v1077 = vrot.slane %v985, 2
        %v1078 = vrot.slane %v986, 2
        %v1079 = vrot.slane %v987, 2
        %vm1080 = vcmp.lt.s32.totalorder %v956, 6
        %v1081 = vsel %vm1080, %v1076, %v1078
        %v1082 = vsel %vm1080, %v1077, %v1079
        %v1083 = vlaneseq
        %v1084 = vshrl.u32 %v1083, 7
        %v1085 = vsub.s32 5, %v1084
        %v1086 = vrot.slane %v988, %v1085
        %v1087 = vlaneseq
        %v1088 = vshrl.u32 %v1087, 7
        %v1089 = vsub.s32 5, %v1088
        %v1090 = vrot.slane %v989, %v1089
        %v1091 = vmul.f32 %v1086, %v1081
        %v1092 = vmul.f32 %v1090, %v1082
        %v1093 = vadd.f32 %v1074, %v1091
        %v1094 = vadd.f32 %v1075, %v1092
        %v1095 = vrot.slane %v984, 3
        %v1096 = vrot.slane %v985, 3
        %v1097 = vrot.slane %v986, 3
        %v1098 = vrot.slane %v987, 3
        %vm1099 = vcmp.lt.s32.totalorder %v956, 5
        %v1100 = vsel %vm1099, %v1095, %v1097
        %v1101 = vsel %vm1099, %v1096, %v1098
        %v1102 = vlaneseq
        %v1103 = vshrl.u32 %v1102, 7
        %v1104 = vsub.s32 6, %v1103
        %v1105 = vrot.slane %v988, %v1104
        %v1106 = vlaneseq
        %v1107 = vshrl.u32 %v1106, 7
        %v1108 = vsub.s32 6, %v1107
        %v1109 = vrot.slane %v989, %v1108
        %v1110 = vmul.f32 %v1105, %v1100
        %v1111 = vmul.f32 %v1109, %v1101
        %v1112 = vadd.f32 %v1093, %v1110
        %v1113 = vadd.f32 %v1094, %v1111
        %v1114 = vpack.c.bf16 %v1112, %v1112
        %v1115 = vpack.c.bf16 %v1113, %v1113
        %v1116 = vld [vmem:[#allocation14] sm:$0xf]
        %v1117 = vld [vmem:[#allocation14 + $0x4] sm:$0xf]
        %v1118 = vld [vmem:[#allocation14 + $0x8] sm:$0xf]
        %v1119 = vld [vmem:[#allocation14 + $0xc] sm:$0xf]
        %v1120 = vld [vmem:[#allocation14 + $0x10] sm:$0xf]
        %v1121 = vld [vmem:[#allocation14 + $0x14] sm:$0xf]
        %v1122 = vld [vmem:[#allocation14 + $0x18] sm:$0xf]
        %v1123 = vld [vmem:[#allocation14 + $0x1c] sm:$0xf]
        %v1124 = vld [vmem:[#allocation14 + $0x20] sm:$0xf]
        %v1125 = vld [vmem:[#allocation14 + $0x24] sm:$0xf]
        %v1126 = vld [vmem:[#allocation14 + $0x28] sm:$0xf]
        %v1127 = vld [vmem:[#allocation14 + $0x2c] sm:$0xf]
        %v1128 = vld [vmem:[#allocation14 + $0x30] sm:$0xf]
        %v1129 = vld [vmem:[#allocation14 + $0x34] sm:$0xf]
        %v1130 = vld [vmem:[#allocation14 + $0x38] sm:$0xf]
        %v1131 = vld [vmem:[#allocation14 + $0x3c] sm:$0xf]
        %v1132 = vld [vmem:[#allocation14 + $0x40] sm:$0xf]
        %v1133 = vld [vmem:[#allocation14 + $0x44] sm:$0xf]
        %v1134 = vld [vmem:[#allocation14 + $0x48] sm:$0xf]
        %v1135 = vld [vmem:[#allocation14 + $0x4c] sm:$0xf]
        %v1136 = vld [vmem:[#allocation14 + $0x50] sm:$0xf]
        %v1137 = vld [vmem:[#allocation14 + $0x54] sm:$0xf]
        %v1138 = vld [vmem:[#allocation14 + $0x58] sm:$0xf]
        %v1139 = vld [vmem:[#allocation14 + $0x5c] sm:$0xf]
        %v1140 = vld [vmem:[#allocation14 + $0x60] sm:$0xf]
        %v1141 = vld [vmem:[#allocation14 + $0x64] sm:$0xf]
        %v1142 = vld [vmem:[#allocation14 + $0x68] sm:$0xf]
        %v1143 = vld [vmem:[#allocation14 + $0x6c] sm:$0xf]
        %v1144 = vld [vmem:[#allocation14 + $0x70] sm:$0xf]
        %v1145 = vld [vmem:[#allocation14 + $0x74] sm:$0xf]
        %v1146 = vld [vmem:[#allocation14 + $0x78] sm:$0xf]
        %v1147 = vld [vmem:[#allocation14 + $0x7c] sm:$0xf]
        %v1180 = vunpack.c.l.b16 %v1116
        %v1181 = vunpack.c.l.b16 %v1117
        %v1182 = vunpack.c.l.b16 %v1118
        %v1183 = vunpack.c.l.b16 %v1119
        %v1184 = vunpack.c.l.b16 %v1120
        %v1185 = vunpack.c.l.b16 %v1121
        %v1186 = vunpack.c.l.b16 %v1122
        %v1187 = vunpack.c.l.b16 %v1123
        %v1188 = vunpack.c.l.b16 %v1124
        %v1189 = vunpack.c.l.b16 %v1125
        %v1190 = vunpack.c.l.b16 %v1126
        %v1191 = vunpack.c.l.b16 %v1127
        %v1192 = vunpack.c.l.b16 %v1128
        %v1193 = vunpack.c.l.b16 %v1129
        %v1194 = vunpack.c.l.b16 %v1130
        %v1195 = vunpack.c.l.b16 %v1131
        %v1196 = vunpack.c.l.b16 %v1132
        %v1197 = vunpack.c.l.b16 %v1133
        %v1198 = vunpack.c.l.b16 %v1134
        %v1199 = vunpack.c.l.b16 %v1135
        %v1200 = vunpack.c.l.b16 %v1136
        %v1201 = vunpack.c.l.b16 %v1137
        %v1202 = vunpack.c.l.b16 %v1138
        %v1203 = vunpack.c.l.b16 %v1139
        %v1204 = vunpack.c.l.b16 %v1140
        %v1205 = vunpack.c.l.b16 %v1141
        %v1206 = vunpack.c.l.b16 %v1142
        %v1207 = vunpack.c.l.b16 %v1143
        %v1208 = vunpack.c.l.b16 %v1144
        %v1209 = vunpack.c.l.b16 %v1145
        %v1210 = vunpack.c.l.b16 %v1146
        %v1211 = vunpack.c.l.b16 %v1147
        %v1212 = vpack.c.b16 %v1181, %v1180
        %v1213 = vpack.c.b16 %v1183, %v1182
        %v1214 = vpack.c.b16 %v1185, %v1184
        %v1215 = vpack.c.b16 %v1187, %v1186
        %v1216 = vpack.c.b16 %v1189, %v1188
        %v1217 = vpack.c.b16 %v1191, %v1190
        %v1218 = vpack.c.b16 %v1193, %v1192
        %v1219 = vpack.c.b16 %v1195, %v1194
        %v1220 = vpack.c.b16 %v1197, %v1196
        %v1221 = vpack.c.b16 %v1199, %v1198
        %v1222 = vpack.c.b16 %v1201, %v1200
        %v1223 = vpack.c.b16 %v1203, %v1202
        %v1224 = vpack.c.b16 %v1205, %v1204
        %v1225 = vpack.c.b16 %v1207, %v1206
        %v1226 = vpack.c.b16 %v1209, %v1208
        %v1227 = vpack.c.b16 %v1211, %v1210
        %1244 = vmatprep.subr.bf16.mxu0 0
        %1245 = vmatpush1.bf16.msra.mxu0 %v1212
        %1246 = vmatprep.subr.bf16.mxu0 0
        %1247 = vmatpush1.bf16.msra.mxu0 %v1213
        %1248 = vmatprep.subr.bf16.mxu0 0
        %1249 = vmatpush1.bf16.msra.mxu0 %v1214
        %1250 = vmatprep.subr.bf16.mxu0 0
        %1251 = vmatpush1.bf16.msra.mxu0 %v1215
        %1252 = vmatprep.subr.bf16.mxu0 0
        %1253 = vmatpush1.bf16.msra.mxu0 %v1216
        %1254 = vmatprep.subr.bf16.mxu0 0
        %1255 = vmatpush1.bf16.msra.mxu0 %v1217
        %1256 = vmatprep.subr.bf16.mxu0 0
        %1257 = vmatpush1.bf16.msra.mxu0 %v1218
        %1258 = vmatprep.subr.bf16.mxu0 0
        %1259 = vmatpush1.bf16.msra.mxu0 %v1219
        %1260 = vmatprep.subr.bf16.mxu0 0
        %1261 = vmatpush1.bf16.msra.mxu0 %v1220
        %1262 = vmatprep.subr.bf16.mxu0 0
        %1263 = vmatpush1.bf16.msra.mxu0 %v1221
        %1264 = vmatprep.subr.bf16.mxu0 0
        %1265 = vmatpush1.bf16.msra.mxu0 %v1222
        %1266 = vmatprep.subr.bf16.mxu0 0
        %1267 = vmatpush1.bf16.msra.mxu0 %v1223
        %1268 = vmatprep.subr.bf16.mxu0 0
        %1269 = vmatpush1.bf16.msra.mxu0 %v1224
        %1270 = vmatprep.subr.bf16.mxu0 0
        %1271 = vmatpush1.bf16.msra.mxu0 %v1225
        %1272 = vmatprep.subr.bf16.mxu0 0
        %1273 = vmatpush1.bf16.msra.mxu0 %v1226
        %1274 = vmatprep.subr.bf16.mxu0 0
        %1275 = vmatpush1.bf16.msra.mxu0 %v1227
        %1276 = vmatprep.mubr.bf16.mxu0 %v1115
        %1277 = vmatmul.mubr.bf16.gmra.mrb[0].mxu0 %v1114
        %v1278 = vpop.f32.mrb[0].mxu0
        %v1279 = vadd.f32 0.0, %v1278
        %v1280 = vpop.f32.mrb[0].mxu0
        %v1281 = vpop.f32.mrb[0].mxu0
        %v1282 = vpop.f32.mrb[0].mxu0
        %1283 = vdwg.mxu0
        %v1284 = vadd.f32 %v721, %v1279
        %v1285 = vld [vmem:[%s8] sm:$0x1]
        %v1286 = vld [vmem:[%s9] sm:$0x1]
        %1287 = vadd.xlane.f32.xlu0 %v1284
        %v1288 = vpop.xlane.xlu0 %1287
        %v1289 = vmul.f32 %v1288, %v732
        %v1290 = vsub.f32 %v1284, %v1289
        %v1291 = vmul.f32 %v1290, %v1290
        %1292 = vadd.xlane.f32.xlu0 %v1291
        %v1293 = vpop.xlane.xlu0 %1292
        %v1294 = vmul.f32 %v1293, %v732
        %v1295 = vadd.f32 %v1294, 1e-05
        %v1296 = vrsqrt.pop %v1295
        %v1297 = vmul.f32 %v1290, %v1296
        %v1299 = vlaneseq
        %v1300 = vshrl.u32 %v1299, 7
        %v1301 = vsub.s32 0, %v1300
        %v1302 = vrot.slane %v1285, %v1301
        %v1304 = vmul.f32 %v1297, %v1302
        %v1306 = vlaneseq
        %v1307 = vshrl.u32 %v1306, 7
        %v1308 = vsub.s32 0, %v1307
        %v1309 = vrot.slane %v1286, %v1308
        %v1311 = vadd.f32 %v1304, %v1309
        %v1312 = vpack.c.bf16 %v1311, %v1311
        %s1313 = sld [smem:[#allocation4]]
        %s1314 = sld [smem:[#allocation5]]
        %v1315 = vld [vmem:[#allocation15] sm:$0xff]
        %v1316 = vld [vmem:[#allocation15 + $0x10] sm:$0xff]
        %v1317 = vld [vmem:[#allocation15 + $0x20] sm:$0xff]
        %v1318 = vld [vmem:[#allocation15 + $0x30] sm:$0xff]
        %v1319 = vld [vmem:[#allocation15 + $0x40] sm:$0xff]
        %v1320 = vld [vmem:[#allocation15 + $0x50] sm:$0xff]
        %v1321 = vld [vmem:[#allocation15 + $0x60] sm:$0xff]
        %v1322 = vld [vmem:[#allocation15 + $0x70] sm:$0xff]
        %v1323 = vld [vmem:[#allocation15 + $0x80] sm:$0xff]
        %v1324 = vld [vmem:[#allocation15 + $0x90] sm:$0xff]
        %v1325 = vld [vmem:[#allocation15 + $0xa0] sm:$0xff]
        %v1326 = vld [vmem:[#allocation15 + $0xb0] sm:$0xff]
        %v1327 = vld [vmem:[#allocation15 + $0xc0] sm:$0xff]
        %v1328 = vld [vmem:[#allocation15 + $0xd0] sm:$0xff]
        %v1329 = vld [vmem:[#allocation15 + $0xe0] sm:$0xff]
        %v1330 = vld [vmem:[#allocation15 + $0xf0] sm:$0xff]
        %v1347 = vunpack.c.l.b16 %v1315
        %v1348 = vunpack.c.h.b16 %v1315
        %v1349 = vunpack.c.l.b16 %v1316
        %v1350 = vunpack.c.h.b16 %v1316
        %v1351 = vunpack.c.l.b16 %v1317
        %v1352 = vunpack.c.h.b16 %v1317
        %v1353 = vunpack.c.l.b16 %v1318
        %v1354 = vunpack.c.h.b16 %v1318
        %v1355 = vunpack.c.l.b16 %v1319
        %v1356 = vunpack.c.h.b16 %v1319
        %v1357 = vunpack.c.l.b16 %v1320
        %v1358 = vunpack.c.h.b16 %v1320
        %v1359 = vunpack.c.l.b16 %v1321
        %v1360 = vunpack.c.h.b16 %v1321
        %v1361 = vunpack.c.l.b16 %v1322
        %v1362 = vunpack.c.h.b16 %v1322
        %v1363 = vunpack.c.l.b16 %v1323
        %v1364 = vunpack.c.h.b16 %v1323
        %v1365 = vunpack.c.l.b16 %v1324
        %v1366 = vunpack.c.h.b16 %v1324
        %v1367 = vunpack.c.l.b16 %v1325
        %v1368 = vunpack.c.h.b16 %v1325
        %v1369 = vunpack.c.l.b16 %v1326
        %v1370 = vunpack.c.h.b16 %v1326
        %v1371 = vunpack.c.l.b16 %v1327
        %v1372 = vunpack.c.h.b16 %v1327
        %v1373 = vunpack.c.l.b16 %v1328
        %v1374 = vunpack.c.h.b16 %v1328
        %v1375 = vunpack.c.l.b16 %v1329
        %v1376 = vunpack.c.h.b16 %v1329
        %v1377 = vunpack.c.l.b16 %v1330
        %v1378 = vunpack.c.h.b16 %v1330
        %v1379 = vpack.c.b16 %v1349, %v1347
        %v1380 = vpack.c.b16 %v1350, %v1348
        %v1381 = vpack.c.b16 %v1353, %v1351
        %v1382 = vpack.c.b16 %v1354, %v1352
        %v1383 = vpack.c.b16 %v1357, %v1355
        %v1384 = vpack.c.b16 %v1358, %v1356
        %v1385 = vpack.c.b16 %v1361, %v1359
        %v1386 = vpack.c.b16 %v1362, %v1360
        %v1387 = vpack.c.b16 %v1365, %v1363
        %v1388 = vpack.c.b16 %v1366, %v1364
        %v1389 = vpack.c.b16 %v1369, %v1367
        %v1390 = vpack.c.b16 %v1370, %v1368
        %v1391 = vpack.c.b16 %v1373, %v1371
        %v1392 = vpack.c.b16 %v1374, %v1372
        %v1393 = vpack.c.b16 %v1377, %v1375
        %v1394 = vpack.c.b16 %v1378, %v1376
        %1411 = vmatprep.subr.bf16.mxu0 %v1380
        %1412 = vmatpush1.bf16.msra.mxu0 %v1379
        %1413 = vmatprep.subr.bf16.mxu0 %v1382
        %1414 = vmatpush1.bf16.msra.mxu0 %v1381
        %1415 = vmatprep.subr.bf16.mxu0 %v1384
        %1416 = vmatpush1.bf16.msra.mxu0 %v1383
        %1417 = vmatprep.subr.bf16.mxu0 %v1386
        %1418 = vmatpush1.bf16.msra.mxu0 %v1385
        %1419 = vmatprep.subr.bf16.mxu0 %v1388
        %1420 = vmatpush1.bf16.msra.mxu0 %v1387
        %1421 = vmatprep.subr.bf16.mxu0 %v1390
        %1422 = vmatpush1.bf16.msra.mxu0 %v1389
        %1423 = vmatprep.subr.bf16.mxu0 %v1392
        %1424 = vmatpush1.bf16.msra.mxu0 %v1391
        %1425 = vmatprep.subr.bf16.mxu0 %v1394
        %1426 = vmatpush1.bf16.msra.mxu0 %v1393
        %1427 = vmatprep.subr.bf16.mxu0 0
        %1428 = vmatpush1.bf16.msra.mxu0 0
        %1429 = vmatprep.subr.bf16.mxu0 0
        %1430 = vmatpush1.bf16.msra.mxu0 0
        %1431 = vmatprep.subr.bf16.mxu0 0
        %1432 = vmatpush1.bf16.msra.mxu0 0
        %1433 = vmatprep.subr.bf16.mxu0 0
        %1434 = vmatpush1.bf16.msra.mxu0 0
        %1435 = vmatprep.subr.bf16.mxu0 0
        %1436 = vmatpush1.bf16.msra.mxu0 0
        %1437 = vmatprep.subr.bf16.mxu0 0
        %1438 = vmatpush1.bf16.msra.mxu0 0
        %1439 = vmatprep.subr.bf16.mxu0 0
        %1440 = vmatpush1.bf16.msra.mxu0 0
        %1441 = vmatprep.subr.bf16.mxu0 0
        %1442 = vmatpush1.bf16.msra.mxu0 0
        %1443 = vmatprep.mubr.bf16.mxu0 0
        %1444 = vmatmul.mubr.bf16.gmra.mrb[0].mxu0 %v1312
        %v1445 = vpop.f32.mrb[0].mxu0
        %v1446 = vadd.f32 0.0, %v1445
        %v1447 = vpop.f32.mrb[0].mxu0
        %v1448 = vadd.f32 0.0, %v1447
        %v1449 = vpop.f32.mrb[0].mxu0
        %v1450 = vpop.f32.mrb[0].mxu0
        %1451 = vdwg.mxu0
        %v1452 = vmax.f32 %v1446, 0.0
        %v1453 = vmax.f32 %v1448, 0.0
        %v1454 = vstv %s1313
        %v1455 = vmul.f32 %v1454, %v1452
        %v1456 = vmul.f32 %v1454, %v1453
        %v1457 = vmul.f32 %v1455, %v1452
        %v1458 = vmul.f32 %v1456, %v1453
        %v1459 = vstv %s1314
        %v1460 = vadd.f32 %v1457, %v1459
        %v1461 = vadd.f32 %v1458, %v1459
        %v1462 = vpack.c.bf16 %v1460, %v1460
        %v1463 = vpack.c.bf16 %v1461, %v1461
        %v1464 = vld [vmem:[#allocation17] sm:$0xf]
        %v1465 = vld [vmem:[#allocation17 + $0x4] sm:$0xf]
        %v1466 = vld [vmem:[#allocation17 + $0x8] sm:$0xf]
        %v1467 = vld [vmem:[#allocation17 + $0xc] sm:$0xf]
        %v1468 = vld [vmem:[#allocation17 + $0x10] sm:$0xf]
        %v1469 = vld [vmem:[#allocation17 + $0x14] sm:$0xf]
        %v1470 = vld [vmem:[#allocation17 + $0x18] sm:$0xf]
        %v1471 = vld [vmem:[#allocation17 + $0x1c] sm:$0xf]
        %v1472 = vld [vmem:[#allocation17 + $0x20] sm:$0xf]
        %v1473 = vld [vmem:[#allocation17 + $0x24] sm:$0xf]
        %v1474 = vld [vmem:[#allocation17 + $0x28] sm:$0xf]
        %v1475 = vld [vmem:[#allocation17 + $0x2c] sm:$0xf]
        %v1476 = vld [vmem:[#allocation17 + $0x30] sm:$0xf]
        %v1477 = vld [vmem:[#allocation17 + $0x34] sm:$0xf]
        %v1478 = vld [vmem:[#allocation17 + $0x38] sm:$0xf]
        %v1479 = vld [vmem:[#allocation17 + $0x3c] sm:$0xf]
        %v1480 = vld [vmem:[#allocation17 + $0x40] sm:$0xf]
        %v1481 = vld [vmem:[#allocation17 + $0x44] sm:$0xf]
        %v1482 = vld [vmem:[#allocation17 + $0x48] sm:$0xf]
        %v1483 = vld [vmem:[#allocation17 + $0x4c] sm:$0xf]
        %v1484 = vld [vmem:[#allocation17 + $0x50] sm:$0xf]
        %v1485 = vld [vmem:[#allocation17 + $0x54] sm:$0xf]
        %v1486 = vld [vmem:[#allocation17 + $0x58] sm:$0xf]
        %v1487 = vld [vmem:[#allocation17 + $0x5c] sm:$0xf]
        %v1488 = vld [vmem:[#allocation17 + $0x60] sm:$0xf]
        %v1489 = vld [vmem:[#allocation17 + $0x64] sm:$0xf]
        %v1490 = vld [vmem:[#allocation17 + $0x68] sm:$0xf]
        %v1491 = vld [vmem:[#allocation17 + $0x6c] sm:$0xf]
        %v1492 = vld [vmem:[#allocation17 + $0x70] sm:$0xf]
        %v1493 = vld [vmem:[#allocation17 + $0x74] sm:$0xf]
        %v1494 = vld [vmem:[#allocation17 + $0x78] sm:$0xf]
        %v1495 = vld [vmem:[#allocation17 + $0x7c] sm:$0xf]
        %v1496 = vld [vmem:[#allocation15 + $0x8] sm:$0xff]
        %v1497 = vld [vmem:[#allocation15 + $0x18] sm:$0xff]
        %v1498 = vld [vmem:[#allocation15 + $0x28] sm:$0xff]
        %v1499 = vld [vmem:[#allocation15 + $0x38] sm:$0xff]
        %v1500 = vld [vmem:[#allocation15 + $0x48] sm:$0xff]
        %v1501 = vld [vmem:[#allocation15 + $0x58] sm:$0xff]
        %v1502 = vld [vmem:[#allocation15 + $0x68] sm:$0xff]
        %v1503 = vld [vmem:[#allocation15 + $0x78] sm:$0xff]
        %v1504 = vld [vmem:[#allocation15 + $0x88] sm:$0xff]
        %v1505 = vld [vmem:[#allocation15 + $0x98] sm:$0xff]
        %v1506 = vld [vmem:[#allocation15 + $0xa8] sm:$0xff]
        %v1507 = vld [vmem:[#allocation15 + $0xb8] sm:$0xff]
        %v1508 = vld [vmem:[#allocation15 + $0xc8] sm:$0xff]
        %v1509 = vld [vmem:[#allocation15 + $0xd8] sm:$0xff]
        %v1510 = vld [vmem:[#allocation15 + $0xe8] sm:$0xff]
        %v1511 = vld [vmem:[#allocation15 + $0xf8] sm:$0xff]
        %v1528 = vunpack.c.l.b16 %v1496
        %v1529 = vunpack.c.h.b16 %v1496
        %v1530 = vunpack.c.l.b16 %v1497
        %v1531 = vunpack.c.h.b16 %v1497
        %v1532 = vunpack.c.l.b16 %v1498
        %v1533 = vunpack.c.h.b16 %v1498
        %v1534 = vunpack.c.l.b16 %v1499
        %v1535 = vunpack.c.h.b16 %v1499
        %v1536 = vunpack.c.l.b16 %v1500
        %v1537 = vunpack.c.h.b16 %v1500
        %v1538 = vunpack.c.l.b16 %v1501
        %v1539 = vunpack.c.h.b16 %v1501
        %v1540 = vunpack.c.l.b16 %v1502
        %v1541 = vunpack.c.h.b16 %v1502
        %v1542 = vunpack.c.l.b16 %v1503
        %v1543 = vunpack.c.h.b16 %v1503
        %v1544 = vunpack.c.l.b16 %v1504
        %v1545 = vunpack.c.h.b16 %v1504
        %v1546 = vunpack.c.l.b16 %v1505
        %v1547 = vunpack.c.h.b16 %v1505
        %v1548 = vunpack.c.l.b16 %v1506
        %v1549 = vunpack.c.h.b16 %v1506
        %v1550 = vunpack.c.l.b16 %v1507
        %v1551 = vunpack.c.h.b16 %v1507
        %v1552 = vunpack.c.l.b16 %v1508
        %v1553 = vunpack.c.h.b16 %v1508
        %v1554 = vunpack.c.l.b16 %v1509
        %v1555 = vunpack.c.h.b16 %v1509
        %v1556 = vunpack.c.l.b16 %v1510
        %v1557 = vunpack.c.h.b16 %v1510
        %v1558 = vunpack.c.l.b16 %v1511
        %v1559 = vunpack.c.h.b16 %v1511
        %v1560 = vpack.c.b16 %v1530, %v1528
        %v1561 = vpack.c.b16 %v1531, %v1529
        %v1562 = vpack.c.b16 %v1534, %v1532
        %v1563 = vpack.c.b16 %v1535, %v1533
        %v1564 = vpack.c.b16 %v1538, %v1536
        %v1565 = vpack.c.b16 %v1539, %v1537
        %v1566 = vpack.c.b16 %v1542, %v1540
        %v1567 = vpack.c.b16 %v1543, %v1541
        %v1568 = vpack.c.b16 %v1546, %v1544
        %v1569 = vpack.c.b16 %v1547, %v1545
        %v1570 = vpack.c.b16 %v1550, %v1548
        %v1571 = vpack.c.b16 %v1551, %v1549
        %v1572 = vpack.c.b16 %v1554, %v1552
        %v1573 = vpack.c.b16 %v1555, %v1553
        %v1574 = vpack.c.b16 %v1558, %v1556
        %v1575 = vpack.c.b16 %v1559, %v1557
        %1592 = vmatprep.subr.bf16.mxu0 %v1561
        %1593 = vmatpush1.bf16.msra.mxu0 %v1560
        %1594 = vmatprep.subr.bf16.mxu0 %v1563
        %1595 = vmatpush1.bf16.msra.mxu0 %v1562
        %1596 = vmatprep.subr.bf16.mxu0 %v1565
        %1597 = vmatpush1.bf16.msra.mxu0 %v1564
        %1598 = vmatprep.subr.bf16.mxu0 %v1567
        %1599 = vmatpush1.bf16.msra.mxu0 %v1566
        %1600 = vmatprep.subr.bf16.mxu0 %v1569
        %1601 = vmatpush1.bf16.msra.mxu0 %v1568
        %1602 = vmatprep.subr.bf16.mxu0 %v1571
        %1603 = vmatpush1.bf16.msra.mxu0 %v1570
        %1604 = vmatprep.subr.bf16.mxu0 %v1573
        %1605 = vmatpush1.bf16.msra.mxu0 %v1572
        %1606 = vmatprep.subr.bf16.mxu0 %v1575
        %1607 = vmatpush1.bf16.msra.mxu0 %v1574
        %1608 = vmatprep.subr.bf16.mxu0 0
        %1609 = vmatpush1.bf16.msra.mxu0 0
        %1610 = vmatprep.subr.bf16.mxu0 0
        %1611 = vmatpush1.bf16.msra.mxu0 0
        %1612 = vmatprep.subr.bf16.mxu0 0
        %1613 = vmatpush1.bf16.msra.mxu0 0
        %1614 = vmatprep.subr.bf16.mxu0 0
        %1615 = vmatpush1.bf16.msra.mxu0 0
        %1616 = vmatprep.subr.bf16.mxu0 0
        %1617 = vmatpush1.bf16.msra.mxu0 0
        %1618 = vmatprep.subr.bf16.mxu0 0
        %1619 = vmatpush1.bf16.msra.mxu0 0
        %1620 = vmatprep.subr.bf16.mxu0 0
        %1621 = vmatpush1.bf16.msra.mxu0 0
        %1622 = vmatprep.subr.bf16.mxu0 0
        %1623 = vmatpush1.bf16.msra.mxu0 0
        %1624 = vmatprep.mubr.bf16.mxu0 0
        %1625 = vmatmul.mubr.bf16.gmra.mrb[0].mxu0 %v1312
        %v1626 = vpop.f32.mrb[0].mxu0
        %v1627 = vadd.f32 0.0, %v1626
        %v1628 = vpop.f32.mrb[0].mxu0
        %v1629 = vadd.f32 0.0, %v1628
        %v1630 = vpop.f32.mrb[0].mxu0
        %v1631 = vpop.f32.mrb[0].mxu0
        %1632 = vdwg.mxu0
        %v1633 = vmax.f32 %v1627, 0.0
        %v1634 = vmax.f32 %v1629, 0.0
        %v1635 = vmul.f32 %v1454, %v1633
        %v1636 = vmul.f32 %v1454, %v1634
        %v1637 = vmul.f32 %v1635, %v1633
        %v1638 = vmul.f32 %v1636, %v1634
        %v1639 = vadd.f32 %v1637, %v1459
        %v1640 = vadd.f32 %v1638, %v1459
        %v1641 = vpack.c.bf16 %v1639, %v1639
        %v1642 = vpack.c.bf16 %v1640, %v1640
        %v1643 = vld [vmem:[#allocation17 + $0x80] sm:$0xf]
        %v1644 = vld [vmem:[#allocation17 + $0x84] sm:$0xf]
        %v1645 = vld [vmem:[#allocation17 + $0x88] sm:$0xf]
        %v1646 = vld [vmem:[#allocation17 + $0x8c] sm:$0xf]
        %v1647 = vld [vmem:[#allocation17 + $0x90] sm:$0xf]
        %v1648 = vld [vmem:[#allocation17 + $0x94] sm:$0xf]
        %v1649 = vld [vmem:[#allocation17 + $0x98] sm:$0xf]
        %v1650 = vld [vmem:[#allocation17 + $0x9c] sm:$0xf]
        %v1651 = vld [vmem:[#allocation17 + $0xa0] sm:$0xf]
        %v1652 = vld [vmem:[#allocation17 + $0xa4] sm:$0xf]
        %v1653 = vld [vmem:[#allocation17 + $0xa8] sm:$0xf]
        %v1654 = vld [vmem:[#allocation17 + $0xac] sm:$0xf]
        %v1655 = vld [vmem:[#allocation17 + $0xb0] sm:$0xf]
        %v1656 = vld [vmem:[#allocation17 + $0xb4] sm:$0xf]
        %v1657 = vld [vmem:[#allocation17 + $0xb8] sm:$0xf]
        %v1658 = vld [vmem:[#allocation17 + $0xbc] sm:$0xf]
        %v1659 = vld [vmem:[#allocation17 + $0xc0] sm:$0xf]
        %v1660 = vld [vmem:[#allocation17 + $0xc4] sm:$0xf]
        %v1661 = vld [vmem:[#allocation17 + $0xc8] sm:$0xf]
        %v1662 = vld [vmem:[#allocation17 + $0xcc] sm:$0xf]
        %v1663 = vld [vmem:[#allocation17 + $0xd0] sm:$0xf]
        %v1664 = vld [vmem:[#allocation17 + $0xd4] sm:$0xf]
        %v1665 = vld [vmem:[#allocation17 + $0xd8] sm:$0xf]
        %v1666 = vld [vmem:[#allocation17 + $0xdc] sm:$0xf]
        %v1667 = vld [vmem:[#allocation17 + $0xe0] sm:$0xf]
        %v1668 = vld [vmem:[#allocation17 + $0xe4] sm:$0xf]
        %v1669 = vld [vmem:[#allocation17 + $0xe8] sm:$0xf]
        %v1670 = vld [vmem:[#allocation17 + $0xec] sm:$0xf]
        %v1671 = vld [vmem:[#allocation17 + $0xf0] sm:$0xf]
        %v1672 = vld [vmem:[#allocation17 + $0xf4] sm:$0xf]
        %v1673 = vld [vmem:[#allocation17 + $0xf8] sm:$0xf]
        %v1674 = vld [vmem:[#allocation17 + $0xfc] sm:$0xf]
        %v1707 = vunpack.c.l.b16 %v1643
        %v1708 = vunpack.c.l.b16 %v1644
        %v1709 = vunpack.c.l.b16 %v1645
        %v1710 = vunpack.c.l.b16 %v1646
        %v1711 = vunpack.c.l.b16 %v1647
        %v1712 = vunpack.c.l.b16 %v1648
        %v1713 = vunpack.c.l.b16 %v1649
        %v1714 = vunpack.c.l.b16 %v1650
        %v1715 = vunpack.c.l.b16 %v1651
        %v1716 = vunpack.c.l.b16 %v1652
        %v1717 = vunpack.c.l.b16 %v1653
        %v1718 = vunpack.c.l.b16 %v1654
        %v1719 = vunpack.c.l.b16 %v1655
        %v1720 = vunpack.c.l.b16 %v1656
        %v1721 = vunpack.c.l.b16 %v1657
        %v1722 = vunpack.c.l.b16 %v1658
        %v1723 = vunpack.c.l.b16 %v1659
        %v1724 = vunpack.c.l.b16 %v1660
        %v1725 = vunpack.c.l.b16 %v1661
        %v1726 = vunpack.c.l.b16 %v1662
        %v1727 = vunpack.c.l.b16 %v1663
        %v1728 = vunpack.c.l.b16 %v1664
        %v1729 = vunpack.c.l.b16 %v1665
        %v1730 = vunpack.c.l.b16 %v1666
        %v1731 = vunpack.c.l.b16 %v1667
        %v1732 = vunpack.c.l.b16 %v1668
        %v1733 = vunpack.c.l.b16 %v1669
        %v1734 = vunpack.c.l.b16 %v1670
        %v1735 = vunpack.c.l.b16 %v1671
        %v1736 = vunpack.c.l.b16 %v1672
        %v1737 = vunpack.c.l.b16 %v1673
        %v1738 = vunpack.c.l.b16 %v1674
        %v1739 = vpack.c.b16 %v1708, %v1707
        %v1740 = vpack.c.b16 %v1710, %v1709
        %v1741 = vpack.c.b16 %v1712, %v1711
        %v1742 = vpack.c.b16 %v1714, %v1713
        %v1743 = vpack.c.b16 %v1716, %v1715
        %v1744 = vpack.c.b16 %v1718, %v1717
        %v1745 = vpack.c.b16 %v1720, %v1719
        %v1746 = vpack.c.b16 %v1722, %v1721
        %v1747 = vpack.c.b16 %v1724, %v1723
        %v1748 = vpack.c.b16 %v1726, %v1725
        %v1749 = vpack.c.b16 %v1728, %v1727
        %v1750 = vpack.c.b16 %v1730, %v1729
        %v1751 = vpack.c.b16 %v1732, %v1731
        %v1752 = vpack.c.b16 %v1734, %v1733
        %v1753 = vpack.c.b16 %v1736, %v1735
        %v1754 = vpack.c.b16 %v1738, %v1737
        %1771 = vmatprep.subr.bf16.mxu0 0
        %1772 = vmatpush1.bf16.msra.mxu0 %v1739
        %1773 = vmatprep.subr.bf16.mxu0 0
        %1774 = vmatpush1.bf16.msra.mxu0 %v1740
        %1775 = vmatprep.subr.bf16.mxu0 0
        %1776 = vmatpush1.bf16.msra.mxu0 %v1741
        %1777 = vmatprep.subr.bf16.mxu0 0
        %1778 = vmatpush1.bf16.msra.mxu0 %v1742
        %1779 = vmatprep.subr.bf16.mxu0 0
        %1780 = vmatpush1.bf16.msra.mxu0 %v1743
        %1781 = vmatprep.subr.bf16.mxu0 0
        %1782 = vmatpush1.bf16.msra.mxu0 %v1744
        %1783 = vmatprep.subr.bf16.mxu0 0
        %1784 = vmatpush1.bf16.msra.mxu0 %v1745
        %1785 = vmatprep.subr.bf16.mxu0 0
        %1786 = vmatpush1.bf16.msra.mxu0 %v1746
        %1787 = vmatprep.subr.bf16.mxu0 0
        %1788 = vmatpush1.bf16.msra.mxu0 %v1747
        %1789 = vmatprep.subr.bf16.mxu0 0
        %1790 = vmatpush1.bf16.msra.mxu0 %v1748
        %1791 = vmatprep.subr.bf16.mxu0 0
        %1792 = vmatpush1.bf16.msra.mxu0 %v1749
        %1793 = vmatprep.subr.bf16.mxu0 0
        %1794 = vmatpush1.bf16.msra.mxu0 %v1750
        %1795 = vmatprep.subr.bf16.mxu0 0
        %1796 = vmatpush1.bf16.msra.mxu0 %v1751
        %1797 = vmatprep.subr.bf16.mxu0 0
        %1798 = vmatpush1.bf16.msra.mxu0 %v1752
        %1799 = vmatprep.subr.bf16.mxu0 0
        %1800 = vmatpush1.bf16.msra.mxu0 %v1753
        %1801 = vmatprep.subr.bf16.mxu0 0
        %1802 = vmatpush1.bf16.msra.mxu0 %v1754
        %1803 = vmatprep.mubr.bf16.mxu0 %v1642
        %1804 = vmatmul.mubr.bf16.gmra.mrb[0].mxu0 %v1641
        %v1805 = vpop.f32.mrb[0].mxu0
        %v1806 = vadd.f32 0.0, %v1805
        %v1807 = vpop.f32.mrb[0].mxu0
        %v1808 = vpop.f32.mrb[0].mxu0
        %v1809 = vpop.f32.mrb[0].mxu0
        %1810 = vdwg.mxu0
        %v1843 = vunpack.c.l.b16 %v1464
        %v1844 = vunpack.c.l.b16 %v1465
        %v1845 = vunpack.c.l.b16 %v1466
        %v1846 = vunpack.c.l.b16 %v1467
        %v1847 = vunpack.c.l.b16 %v1468
        %v1848 = vunpack.c.l.b16 %v1469
        %v1849 = vunpack.c.l.b16 %v1470
        %v1850 = vunpack.c.l.b16 %v1471
        %v1851 = vunpack.c.l.b16 %v1472
        %v1852 = vunpack.c.l.b16 %v1473
        %v1853 = vunpack.c.l.b16 %v1474
        %v1854 = vunpack.c.l.b16 %v1475
        %v1855 = vunpack.c.l.b16 %v1476
        %v1856 = vunpack.c.l.b16 %v1477
        %v1857 = vunpack.c.l.b16 %v1478
        %v1858 = vunpack.c.l.b16 %v1479
        %v1859 = vunpack.c.l.b16 %v1480
        %v1860 = vunpack.c.l.b16 %v1481
        %v1861 = vunpack.c.l.b16 %v1482
        %v1862 = vunpack.c.l.b16 %v1483
        %v1863 = vunpack.c.l.b16 %v1484
        %v1864 = vunpack.c.l.b16 %v1485
        %v1865 = vunpack.c.l.b16 %v1486
        %v1866 = vunpack.c.l.b16 %v1487
        %v1867 = vunpack.c.l.b16 %v1488
        %v1868 = vunpack.c.l.b16 %v1489
        %v1869 = vunpack.c.l.b16 %v1490
        %v1870 = vunpack.c.l.b16 %v1491
        %v1871 = vunpack.c.l.b16 %v1492
        %v1872 = vunpack.c.l.b16 %v1493
        %v1873 = vunpack.c.l.b16 %v1494
        %v1874 = vunpack.c.l.b16 %v1495
        %v1875 = vpack.c.b16 %v1844, %v1843
        %v1876 = vpack.c.b16 %v1846, %v1845
        %v1877 = vpack.c.b16 %v1848, %v1847
        %v1878 = vpack.c.b16 %v1850, %v1849
        %v1879 = vpack.c.b16 %v1852, %v1851
        %v1880 = vpack.c.b16 %v1854, %v1853
        %v1881 = vpack.c.b16 %v1856, %v1855
        %v1882 = vpack.c.b16 %v1858, %v1857
        %v1883 = vpack.c.b16 %v1860, %v1859
        %v1884 = vpack.c.b16 %v1862, %v1861
        %v1885 = vpack.c.b16 %v1864, %v1863
        %v1886 = vpack.c.b16 %v1866, %v1865
        %v1887 = vpack.c.b16 %v1868, %v1867
        %v1888 = vpack.c.b16 %v1870, %v1869
        %v1889 = vpack.c.b16 %v1872, %v1871
        %v1890 = vpack.c.b16 %v1874, %v1873
        %1907 = vmatprep.subr.bf16.mxu0 0
        %1908 = vmatpush1.bf16.msra.mxu0 %v1875
        %1909 = vmatprep.subr.bf16.mxu0 0
        %1910 = vmatpush1.bf16.msra.mxu0 %v1876
        %1911 = vmatprep.subr.bf16.mxu0 0
        %1912 = vmatpush1.bf16.msra.mxu0 %v1877
        %1913 = vmatprep.subr.bf16.mxu0 0
        %1914 = vmatpush1.bf16.msra.mxu0 %v1878
        %1915 = vmatprep.subr.bf16.mxu0 0
        %1916 = vmatpush1.bf16.msra.mxu0 %v1879
        %1917 = vmatprep.subr.bf16.mxu0 0
        %1918 = vmatpush1.bf16.msra.mxu0 %v1880
        %1919 = vmatprep.subr.bf16.mxu0 0
        %1920 = vmatpush1.bf16.msra.mxu0 %v1881
        %1921 = vmatprep.subr.bf16.mxu0 0
        %1922 = vmatpush1.bf16.msra.mxu0 %v1882
        %1923 = vmatprep.subr.bf16.mxu0 0
        %1924 = vmatpush1.bf16.msra.mxu0 %v1883
        %1925 = vmatprep.subr.bf16.mxu0 0
        %1926 = vmatpush1.bf16.msra.mxu0 %v1884
        %1927 = vmatprep.subr.bf16.mxu0 0
        %1928 = vmatpush1.bf16.msra.mxu0 %v1885
        %1929 = vmatprep.subr.bf16.mxu0 0
        %1930 = vmatpush1.bf16.msra.mxu0 %v1886
        %1931 = vmatprep.subr.bf16.mxu0 0
        %1932 = vmatpush1.bf16.msra.mxu0 %v1887
        %1933 = vmatprep.subr.bf16.mxu0 0
        %1934 = vmatpush1.bf16.msra.mxu0 %v1888
        %1935 = vmatprep.subr.bf16.mxu0 0
        %1936 = vmatpush1.bf16.msra.mxu0 %v1889
        %1937 = vmatprep.subr.bf16.mxu0 0
        %1938 = vmatpush1.bf16.msra.mxu0 %v1890
        %1939 = vmatprep.mubr.bf16.mxu0 %v1463
        %1940 = vmatmul.mubr.bf16.gmra.mrb[0].mxu0 %v1462
        %v1941 = vpop.f32.mrb[0].mxu0
        %v1942 = vadd.f32 %v1806, %v1941
        %v1943 = vpop.f32.mrb[0].mxu0
        %v1944 = vpop.f32.mrb[0].mxu0
        %v1945 = vpop.f32.mrb[0].mxu0
        %1946 = vdwg.mxu0
        %v1947 = vadd.f32 %v1284, %v1942
        %1948 = vst [vmem:[%s713] sm:$0xff] %v1947
        %s1949 = sand.u32 %s433, 1
        %s1950 = scalar_lea.sflag [#allocation8], %s1949
        %s1951 = sand.u32 %s433, 1
        %s1952 = smul.addr %s1951, 8
        %s1953 = scalar_lea.vmem [#allocation18], %s1952
        // Predicated region
        $region113: #{tpu_custom_call.1} parent=83 // pred_check
          %p1954 = pneg %p443
        $region114: #{tpu_custom_call.1} parent=83 // pred_check_branch
          %1956 = sbr.rel (%p1954) target = $region116
        $region115: #{tpu_custom_call.1} parent=83 // pred_region
          %s1958 = ssub.s32 128, 128
          %1959 = vsyncadd %s1950, %s1958
          %s1960 = smul.addr %s46, 4
          %s1961 = sadd.s32 %s47, %s1960
          %s1962 = smul.addr %s1961, 128
          %s1963 = scalar_lea.hbm %s16, %s1962
          %s1965 = sshll.u32 %s1953, 4
          %s1966 = int_to_ptr.vmem [resolvable:$true] %s1965
          %1968 = dma.vmem_to_hbm [thread:$0]  %s1966, 128, %s1963, %s1950
        $region116: #{tpu_custom_call.1} parent=83 // pred_fallthru
          _
      $region84: #{tpu_custom_call.1} parent=5 // pred_fallthru
        _
      %p1969 = scmp.le.s32.totalorder 2, %s37
      // Predicated region
      $region117: #{tpu_custom_call.1} parent=5 // pred_check
        %p1970 = pneg %p1969
      $region118: #{tpu_custom_call.1} parent=5 // pred_check_branch
        %1972 = sbr.rel (%p1970) target = $region120
      $region119: #{tpu_custom_call.1} parent=5 // pred_region
        %s1973 = ssub.s32 %s37, 2
        // Predicated region
        $region121: #{tpu_custom_call.1} parent=119 // pred_check
          %p1974 = pneg %p449
        $region122: #{tpu_custom_call.1} parent=119 // pred_check_branch
          %1976 = sbr.rel (%p1974) target = $region124
        $region123: #{tpu_custom_call.1} parent=119 // pred_region
          %s1977 = sand.u32 %s434, 1
          %s1978 = scalar_lea.sflag [#allocation8], %s1977
          %s1979 = sand.u32 %s434, 1
          %s1980 = smul.addr %s1979, 8
          %s1981 = scalar_lea.vmem [#allocation18], %s1980
          %1982 = dma.done %s1978, 128
        $region124: #{tpu_custom_call.1} parent=119 // pred_fallthru
          _
      $region120: #{tpu_custom_call.1} parent=5 // pred_fallthru
        _
    $region6: #{tpu_custom_call.1} parent=1 // loop_footer
      %s41 = sadd.s32 1, %s37
    $region7: #{tpu_custom_call.1} parent=1 // loop_footer_branch
      %36 = sbr.rel target = $region3
    $region8: #{tpu_custom_call.1} parent=1 // loop_exit
      _
    %1983 = vsyncpa [#allocation7], 1
    %s1984 = scalar_lea.sflag [#allocation7], 1
    %1985 = vsyncpa %s1984, 1
    %1986 = vsyncpa [#allocation10], 1
    %s1987 = scalar_lea.sflag [#allocation10], 1
    %1988 = vsyncpa %s1987, 1
    %1989 = vsyncpa [#allocation13], 1
    %1990 = vsyncpa [#allocation16], 1
    %1991 = vsyncpa [#allocation8], 1
    %s1992 = scalar_lea.sflag [#allocation8], 1
    %1993 = vsyncpa %s1992, 1

</llo_original>
